<compile_context>
chip_gen: v7x
topology: tpu7x:2x2x1
jax: 0.10.0
libtpu: 0.0.40
codegen_flags: <defaults>
</compile_context>

<pallas_src>
import functools

import numpy as np
import jax
import jax.numpy as jnp
from jax.experimental import pallas as pl
from jax.experimental.pallas import tpu as pltpu


def _attention_kernel(*refs, inv_sqrt_dim: float, has_mask: bool):
    if has_mask:
        q_ref, k_ref, v_ref, m_ref, ctx_ref, attn_ref = refs
    else:
        q_ref, k_ref, v_ref, ctx_ref, attn_ref = refs
        m_ref = None

    # Fold the 1/sqrt(dim) scale into the small (tq, D) query tile.
    q = q_ref[0] * inv_sqrt_dim          # (tq, D)
    k = k_ref[0]                         # (Lk, D)
    v = v_ref[0]                         # (Lk, D)

    # score = (Q/sqrt(dim)) @ K^T  -- NT dot_general contracting on D.
    score = jax.lax.dot_general(
        q, k, (((1,), (1,)), ((), ())),
        preferred_element_type=jnp.float32)          # (tq, Lk) f32

    if has_mask:
        # nonzero -> masked (torch masked_fill_(mask, -10000.0))
        score = jnp.where(m_ref[0] != 0, jnp.float32(-10000.0), score)

    # Numerically stable, exact softmax over the key axis.
    row_max = jnp.max(score, axis=-1, keepdims=True)
    p = jnp.exp(score - row_max)
    denom = jnp.sum(p, axis=-1, keepdims=True)
    inv_denom = 1.0 / denom              # exact (tq, 1) divide; off critical path
    attn = (p * inv_denom).astype(attn_ref.dtype)    # single cast, reused below
    attn_ref[0] = attn

    # context = attn @ V with f32 accumulation.
    attn_mm = attn if attn.dtype == v.dtype else attn.astype(v.dtype)
    ctx = jnp.dot(attn_mm, v, preferred_element_type=jnp.float32)
    ctx_ref[0] = ctx.astype(ctx_ref.dtype)


def _vmem_cap_bytes() -> int:
    """Physical VMEM of the current chip; conservative fallback = v7x (64 MiB)."""
    try:
        cap = int(pltpu.get_tpu_info().vmem_capacity_bytes)
        if cap > 0:
            return cap
    except Exception:
        pass
    return 64 * 2**20


def _nbytes(shape, dtype) -> int:
    return int(np.prod(shape)) * np.dtype(dtype).itemsize


def _vmem_estimate(tq, lk, d, in_dtype, out_dtype, has_mask, kv_buffers) -> int:
    est = 2 * _nbytes((tq, d), in_dtype)                  # Q (double buffered)
    est += kv_buffers * 2 * _nbytes((lk, d), in_dtype)    # K + V
    est += 2 * _nbytes((tq, d), out_dtype)                # ctx (double buffered)
    est += 2 * _nbytes((tq, lk), out_dtype)               # attn (double buffered)
    if has_mask:
        est += 2 * _nbytes((tq, lk), jnp.int8)
    est += 4 * _nbytes((tq, lk), jnp.float32)             # f32 score/p temporaries
    return est


def _pick_q_tile(lq: int, dtype, target: int) -> int:
    """Largest convenient q tile: `target` if it divides Lq, else the largest
    packing-aligned divisor of Lq (<=256), else the full Lq (always legal)."""
    itemsize = np.dtype(dtype).itemsize
    # Sub-32-bit dtypes pack along sublanes -> tile must be a multiple of the
    # packed sublane count (bf16: 16, int8/fp8: 32).
    step = {4: 8, 2: 16, 1: 32}.get(itemsize, 8)
    if lq % target == 0:
        return target
    start = min(lq, 256)
    start -= start % step
    for t in range(start, 0, -step):
        if lq % t == 0:
            return t
    return lq


def _prepare_mask_3d(mask, B, Lq, Lk):
    """3-D path: return (int8 mask of shape (mb, Lq, Lk), index_map)."""
    mask = jnp.asarray(mask)
    while mask.ndim < 3:
        mask = mask[None]
    mb = mask.shape[0]
    if mb not in (1, B):
        mask = jnp.broadcast_to(mask, (B, Lq, Lk))
        mb = B
    mask = jnp.broadcast_to(mask, (mb, Lq, Lk)).astype(jnp.int8)
    if mb == 1:
        idx = lambda b, qi: (0, qi, 0)
    else:
        idx = lambda b, qi: (b, qi, 0)
    return mask, idx


def _prepare_mask_4d(mask, B0, H, Lq, Lk):
    """4-D path (heads folded into batch): keep the mask at its broadcast
    batch/head size and pin the broadcast dims in the index_map."""
    mask = jnp.asarray(mask)
    while mask.ndim < 4:
        mask = mask[None]
    mb, mh = mask.shape[0], mask.shape[1]
    if mb not in (1, B0) or mh not in (1, H):
        mask = jnp.broadcast_to(mask, (B0, H, Lq, Lk))
        mb, mh = B0, H
    mask = jnp.broadcast_to(mask, (mb, mh, Lq, Lk))
    mask = mask.reshape(mb * mh, Lq, Lk).astype(jnp.int8)
    if mb == 1 and mh == 1:
        idx = lambda b, qi: (0, qi, 0)
    elif mb == B0 and mh == H:
        idx = lambda b, qi: (b, qi, 0)
    elif mb == B0:                       # mh == 1: shared across heads
        idx = lambda b, qi: (b // H, qi, 0)
    else:                                # mb == 1, mh == H: shared across batch
        idx = lambda b, qi: (b % H, qi, 0)
    return mask, idx


def dot_product_attention(query, key, value, mask=None, dim=None, block_q=None):
    """Returns (context, attn), matching DotProductAttention.forward().

    query: (B, Lq, D) or (B, H, Lq, D)
    key:   (B, Lk, D) or (B, H, Lk, D)
    value: (B, Lk, D) or (B, H, Lk, D)
    mask:  optional bool/int tensor broadcastable to the score shape; nonzero
           entries are filled with -10000 before the softmax.
    dim:   the `dim` given to the module's __init__ (defaults to D).
    """
    orig_rank = query.ndim
    mask_info = None
    if orig_rank == 4:
        B0, H, Lq, D = query.shape
        Lk = key.shape[2]
        query = query.reshape(B0 * H, Lq, D)
        key = key.reshape(B0 * H, Lk, D)
        value = value.reshape(B0 * H, Lk, D)
        if mask is not None:
            mask_info = _prepare_mask_4d(mask, B0, H, Lq, Lk)
    else:
        B0, H = query.shape[0], None
        Lq, D = query.shape[1], query.shape[2]
        Lk = key.shape[1]
        if mask is not None:
            mask_info = _prepare_mask_3d(mask, B0, Lq, Lk)

    B, Lq, D = query.shape
    Lk = key.shape[1]

    if dim is None:
        dim = D
    inv_sqrt_dim = float(1.0 / np.sqrt(dim))
    has_mask = mask_info is not None
    out_dtype = query.dtype

    vmem_cap = _vmem_cap_bytes()

    # q-tile selection: default 128; bump to 256 when Lq allows and the VMEM
    # estimate stays comfortably inside the chip budget (v6e-style win; v7x
    # with large Lk naturally stays at 128).
    if block_q is None:
        block_q = 128
        if Lq % 256 == 0 and _vmem_estimate(
                256, Lk, D, query.dtype, out_dtype, has_mask,
                kv_buffers=1) <= vmem_cap // 2:
            block_q = 256
    tq = _pick_q_tile(Lq, query.dtype, block_q)
    n_q = Lq // tq

    inputs = [query, key, value]
    if has_mask:
        inputs.append(mask_info[0])

    out_shape = (
        jax.ShapeDtypeStruct((B, Lq, D), out_dtype),     # context
        jax.ShapeDtypeStruct((B, Lq, Lk), out_dtype),    # attn
    )
    out_specs = [
        pl.BlockSpec((1, tq, D), lambda b, qi: (b, qi, 0)),
        pl.BlockSpec((1, tq, Lk), lambda b, qi: (b, qi, 0)),
    ]

    out_itemsize = np.dtype(out_dtype).itemsize
    bytes_accessed = (query.size * query.dtype.itemsize
                      + key.size * key.dtype.itemsize
                      + value.size * value.dtype.itemsize
                      + (mask_info[0].size if has_mask else 0)      # int8 mask
                      + B * Lq * D * out_itemsize                   # ctx
                      + B * Lq * Lk * out_itemsize)                 # attn
    cost = pl.CostEstimate(
        flops=4 * B * Lq * Lk * D,
        transcendentals=B * Lq * Lk,
        bytes_accessed=int(bytes_accessed))

    kernel = functools.partial(_attention_kernel,
                               inv_sqrt_dim=inv_sqrt_dim, has_mask=has_mask)

    def _build_in_specs(single_buffer_kv):
        # K/V index_maps are constant across the q-tile axis; a second
        # pipeline buffer only helps at batch boundaries (one exposed Lk*D
        # DMA per batch), so request single buffering to halve VMEM use.
        kv_kwargs = {}
        if single_buffer_kv and hasattr(pl, "Buffered"):
            try:
                kv_kwargs = {"pipeline_mode": pl.Buffered(1)}
            except Exception:
                kv_kwargs = {}
        kv_map = lambda b, qi: (b, 0, 0)
        try:
            k_spec = pl.BlockSpec((1, Lk, D), kv_map, **kv_kwargs)
        except TypeError:
            kv_kwargs = {}
            k_spec = pl.BlockSpec((1, Lk, D), kv_map)
        v_spec = pl.BlockSpec((1, Lk, D), kv_map, **kv_kwargs)
        specs = [pl.BlockSpec((1, tq, D), lambda b, qi: (b, qi, 0)),
                 k_spec, v_spec]
        if has_mask:
            # int8 mask: 4x less HBM traffic / VMEM than int32.
            specs.append(pl.BlockSpec((1, tq, Lk), mask_info[1]))
        return specs

    def _run(single_buffer_kv):
        kv_buffers = 1 if single_buffer_kv else 2
        est = _vmem_estimate(tq, Lk, D, query.dtype, out_dtype, has_mask,
                             kv_buffers)
        # Clamp the request to ~75% of physical VMEM (64 MiB on v7x, 128 MiB
        # on v5e/v6e) leaving headroom for compiler temporaries.
        vmem_limit = int(min(max(16 * 2**20, 2 * est), (3 * vmem_cap) // 4))
        return pl.pallas_call(
            kernel,
            out_shape=out_shape,
            grid_spec=pltpu.PrefetchScalarGridSpec(
                num_scalar_prefetch=0,
                grid=(B, n_q),
                in_specs=_build_in_specs(single_buffer_kv),
                out_specs=out_specs,
            ),
            compiler_params=pltpu.CompilerParams(
                dimension_semantics=("parallel", "parallel"),
                vmem_limit_bytes=vmem_limit,
            ),
            cost_estimate=cost,
        )(*inputs)

    try:
        context, attn = _run(single_buffer_kv=True)
    except Exception:
        # Fall back to the default double-buffered pipeline if this jax /
        # Mosaic version rejects single-buffered BlockSpecs.
        context, attn = _run(single_buffer_kv=False)

    if orig_rank == 4:
        context = context.reshape(B0, H, Lq, D)
        attn = attn.reshape(B0, H, Lq, Lk)
    return context, attn


def _reference(query, key, value, mask, dim):
    scale = 1.0 / np.sqrt(dim)
    if query.ndim == 3:
        score = jnp.einsum("bqd,bkd->bqk", query, key) * scale
    else:
        score = jnp.einsum("bhqd,bhkd->bhqk", query, key) * scale
    if mask is not None:
        score = jnp.where(mask, jnp.float32(-10000.0), score)
    attn = jax.nn.softmax(score, axis=-1)
    if query.ndim == 3:
        context = jnp.einsum("bqk,bkd->bqd", attn, value)
    else:
        context = jnp.einsum("bhqk,bhkd->bhqd", attn, value)
    return context, attn


if __name__ == "__main__":
    root = jax.random.PRNGKey(0)
    kq, kk, kv = jax.random.split(root, 3)

    # --- 3-D (bmm) path, no mask ---
    B, Lq, Lk, D = 2, 128, 128, 64
    q = jax.random.normal(kq, (B, Lq, D), dtype=jnp.float32)
    k = jax.random.normal(kk, (B, Lk, D), dtype=jnp.float32)
    v = jax.random.normal(kv, (B, Lk, D), dtype=jnp.float32)

    ctx, attn = dot_product_attention(q, k, v, mask=None, dim=D)
    jax.block_until_ready((ctx, attn))
    ctx_r, attn_r = _reference(q, k, v, None, D)
    assert jnp.allclose(ctx, ctx_r, atol=2e-3, rtol=2e-3)
    assert jnp.allclose(attn, attn_r, atol=2e-3, rtol=2e-3)
    assert jnp.allclose(jnp.sum(attn, axis=-1), 1.0, atol=1e-3)

    # --- 3-D path, single shared 2-D causal mask (True -> masked) ---
    # Exercises the mask-dedup path (mask batch dim pinned to 0 in index_map).
    causal = jnp.triu(jnp.ones((Lq, Lk), dtype=bool), k=1)
    ctx_m, attn_m = dot_product_attention(q, k, v, mask=causal, dim=D)
    jax.block_until_ready((ctx_m, attn_m))
    ctx_mr, attn_mr = _reference(q, k, v, causal, D)
    assert jnp.allclose(ctx_m, ctx_mr, atol=2e-3, rtol=2e-3)
    assert jnp.allclose(attn_m, attn_mr, atol=2e-3, rtol=2e-3)
    assert jnp.allclose(jnp.sum(attn_m, axis=-1), 1.0, atol=1e-3)

    # --- 4-D (multi-head) path, no mask ---
    B4, H4, L4, D4 = 2, 2, 64, 32
    kq4, kk4, kv4 = jax.random.split(jax.random.PRNGKey(1), 3)
    q4 = jax.random.normal(kq4, (B4, H4, L4, D4), dtype=jnp.float32)
    k4 = jax.random.normal(kk4, (B4, H4, L4, D4), dtype=jnp.float32)
    v4 = jax.random.normal(kv4, (B4, H4, L4, D4), dtype=jnp.float32)
    ctx4, attn4 = dot_product_attention(q4, k4, v4, mask=None, dim=D4)
    jax.block_until_ready((ctx4, attn4))
    ctx4_r, attn4_r = _reference(q4, k4, v4, None, D4)
    assert jnp.allclose(ctx4, ctx4_r, atol=2e-3, rtol=2e-3)
    assert jnp.allclose(attn4, attn4_r, atol=2e-3, rtol=2e-3)

    # --- 4-D path with a per-batch mask shared across heads (B0, 1, L, L) ---
    # Exercises the b // H mask index_map (no densification across heads).
    mask4 = jnp.triu(jnp.ones((L4, L4), dtype=bool), k=1)[None, None]
    mask4 = jnp.broadcast_to(mask4, (B4, 1, L4, L4))
    ctx4m, attn4m = dot_product_attention(q4, k4, v4, mask=mask4, dim=D4)
    jax.block_until_ready((ctx4m, attn4m))
    ctx4m_r, attn4m_r = _reference(q4, k4, v4, mask4, D4)
    assert jnp.allclose(ctx4m, ctx4m_r, atol=2e-3, rtol=2e-3)
    assert jnp.allclose(attn4m, attn4m_r, atol=2e-3, rtol=2e-3)

    print("KERNEL_OK")
</pallas_src>

<mosaic_0001>
module attributes {stable_mosaic.version = 11 : i64} {
  func.func @_attention_kernel(%arg0: i32, %arg1: i32, %arg2: memref<1x128x64xf32, #tpu.memory_space<vmem>>, %arg3: memref<1x128x64xf32, #tpu.memory_space<vmem>>, %arg4: memref<1x128x64xf32, #tpu.memory_space<vmem>>, %arg5: memref<1x128x64xf32, #tpu.memory_space<vmem>>, %arg6: memref<1x128x128xf32, #tpu.memory_space<vmem>>) attributes {dimension_semantics = [#tpu.dimension_semantics<parallel>, #tpu.dimension_semantics<parallel>], iteration_bounds = array<i64: 2, 1>, scalar_prefetch = 0 : i64, scratch_operands = 0 : i64, tpu.core_type = #tpu.core_type<tc>, window_params = [{transform_indices = @transform_0, window_bounds = array<i64: 1, 128, 64>}, {pipeline_mode = #tpu.pipeline_mode<synchronous>, transform_indices = @transform_1, window_bounds = array<i64: 1, 128, 64>}, {pipeline_mode = #tpu.pipeline_mode<synchronous>, transform_indices = @transform_2, window_bounds = array<i64: 1, 128, 64>}, {transform_indices = @transform_3, window_bounds = array<i64: 1, 128, 64>}, {transform_indices = @transform_4, window_bounds = array<i64: 1, 128, 128>}]} {
    %c0 = arith.constant 0 : index
    %c0_0 = arith.constant 0 : index
    %c0_1 = arith.constant 0 : index
    %0 = vector.load %arg2[%c0, %c0_0, %c0_1] : memref<1x128x64xf32, #tpu.memory_space<vmem>>, vector<1x128x64xf32>
    %1 = vector.shape_cast %0 : vector<1x128x64xf32> to vector<128x64xf32>
    %cst = arith.constant 1.250000e-01 : f32
    %2 = vector.broadcast %cst : f32 to vector<128x64xf32>
    %3 = arith.mulf %1, %2 : vector<128x64xf32>
    %c0_2 = arith.constant 0 : index
    %c0_3 = arith.constant 0 : index
    %c0_4 = arith.constant 0 : index
    %4 = vector.load %arg3[%c0_2, %c0_3, %c0_4] : memref<1x128x64xf32, #tpu.memory_space<vmem>>, vector<1x128x64xf32>
    %5 = vector.shape_cast %4 : vector<1x128x64xf32> to vector<128x64xf32>
    %c0_5 = arith.constant 0 : index
    %c0_6 = arith.constant 0 : index
    %c0_7 = arith.constant 0 : index
    %6 = vector.load %arg4[%c0_5, %c0_6, %c0_7] : memref<1x128x64xf32, #tpu.memory_space<vmem>>, vector<1x128x64xf32>
    %7 = vector.shape_cast %6 : vector<1x128x64xf32> to vector<128x64xf32>
    %cst_8 = arith.constant dense<0.000000e+00> : vector<128x128xf32>
    %8 = tpu.matmul %3, %5, %cst_8 {dimension_numbers = #tpu.dot_dimension_numbers<[1], [1], [0], [0], [0, 0, 1, 0], [], []>} : vector<128x64xf32>, vector<128x64xf32>, vector<128x128xf32> -> vector<128x128xf32>
    %cst_9 = arith.constant dense<0xFF800000> : vector<128xf32>
    %9 = vector.multi_reduction <maximumf>, %8, %cst_9 [1] : vector<128x128xf32> to vector<128xf32>
    %10 = vector.shape_cast %9 : vector<128xf32> to vector<128x1xf32>
    %11 = vector.broadcast %10 : vector<128x1xf32> to vector<128x128xf32>
    %12 = arith.subf %8, %11 : vector<128x128xf32>
    %13 = math.exp %12 : vector<128x128xf32>
    %cst_10 = arith.constant dense<0.000000e+00> : vector<128xf32>
    %14 = vector.multi_reduction <add>, %13, %cst_10 [1] : vector<128x128xf32> to vector<128xf32>
    %15 = vector.shape_cast %14 : vector<128xf32> to vector<128x1xf32>
    %cst_11 = arith.constant 1.000000e+00 : f32
    %16 = vector.broadcast %cst_11 : f32 to vector<128x1xf32>
    %17 = arith.divf %16, %15 : vector<128x1xf32>
    %18 = vector.broadcast %17 : vector<128x1xf32> to vector<128x128xf32>
    %19 = arith.mulf %13, %18 : vector<128x128xf32>
    %c0_12 = arith.constant 0 : index
    %c0_13 = arith.constant 0 : index
    %c0_14 = arith.constant 0 : index
    %20 = vector.load %arg6[%c0_12, %c0_13, %c0_14] : memref<1x128x128xf32, #tpu.memory_space<vmem>>, vector<1x128x128xf32>
    %21 = vector.shape_cast %20 : vector<1x128x128xf32> to vector<128x128xf32>
    %22 = vector.shape_cast %19 : vector<128x128xf32> to vector<1x128x128xf32>
    tpu.vector_store %arg6[%c0_12, %c0_13, %c0_14], %22 {strides = array<i32>} : memref<1x128x128xf32, #tpu.memory_space<vmem>>, vector<1x128x128xf32>,
    %cst_15 = arith.constant dense<0.000000e+00> : vector<128x64xf32>
    %23 = tpu.matmul %19, %7, %cst_15 {dimension_numbers = #tpu.dot_dimension_numbers<[1], [0], [0], [1], [0, 0, 1, 1], [], []>} : vector<128x128xf32>, vector<128x64xf32>, vector<128x64xf32> -> vector<128x64xf32>
    %c0_16 = arith.constant 0 : index
    %c0_17 = arith.constant 0 : index
    %c0_18 = arith.constant 0 : index
    %24 = vector.load %arg5[%c0_16, %c0_17, %c0_18] : memref<1x128x64xf32, #tpu.memory_space<vmem>>, vector<1x128x64xf32>
    %25 = vector.shape_cast %24 : vector<1x128x64xf32> to vector<128x64xf32>
    %26 = vector.shape_cast %23 : vector<128x64xf32> to vector<1x128x64xf32>
    tpu.vector_store %arg5[%c0_16, %c0_17, %c0_18], %26 {strides = array<i32>} : memref<1x128x64xf32, #tpu.memory_space<vmem>>, vector<1x128x64xf32>,
    return
  }
  func.func @transform_0(%arg0: i32, %arg1: i32) -> (i32, i32, i32) {
    %c0_i32 = arith.constant 0 : i32
    %c0_i32_0 = arith.constant 0 : i32
    return %arg0, %arg1, %c0_i32 : i32, i32, i32
  }
  func.func @transform_1(%arg0: i32, %arg1: i32) -> (i32, i32, i32) {
    %c0_i32 = arith.constant 0 : i32
    %c0_i32_0 = arith.constant 0 : i32
    %c0_i32_1 = arith.constant 0 : i32
    return %arg0, %c0_i32, %c0_i32_0 : i32, i32, i32
  }
  func.func @transform_2(%arg0: i32, %arg1: i32) -> (i32, i32, i32) {
    %c0_i32 = arith.constant 0 : i32
    %c0_i32_0 = arith.constant 0 : i32
    %c0_i32_1 = arith.constant 0 : i32
    return %arg0, %c0_i32, %c0_i32_0 : i32, i32, i32
  }
  func.func @transform_3(%arg0: i32, %arg1: i32) -> (i32, i32, i32) {
    %c0_i32 = arith.constant 0 : i32
    %c0_i32_0 = arith.constant 0 : i32
    return %arg0, %arg1, %c0_i32 : i32, i32, i32
  }
  func.func @transform_4(%arg0: i32, %arg1: i32) -> (i32, i32, i32) {
    %c0_i32 = arith.constant 0 : i32
    %c0_i32_0 = arith.constant 0 : i32
    return %arg0, %arg1, %c0_i32 : i32, i32, i32
  }
}

module attributes {stable_mosaic.version = 11 : i64} {
  func.func @_attention_kernel(%arg0: i32, %arg1: i32, %arg2: memref<1x128x64xf32, #tpu.memory_space<vmem>>, %arg3: memref<1x128x64xf32, #tpu.memory_space<vmem>>, %arg4: memref<1x128x64xf32, #tpu.memory_space<vmem>>, %arg5: memref<1x128x64xf32, #tpu.memory_space<vmem>>, %arg6: memref<1x128x128xf32, #tpu.memory_space<vmem>>) attributes {dimension_semantics = [#tpu.dimension_semantics<parallel>, #tpu.dimension_semantics<parallel>], iteration_bounds = array<i64: 2, 1>, scalar_prefetch = 0 : i64, scratch_operands = 0 : i64, tpu.core_type = #tpu.core_type<tc>, window_params = [{transform_indices = @transform_0, window_bounds = array<i64: 1, 128, 64>}, {transform_indices = @transform_1, window_bounds = array<i64: 1, 128, 64>}, {transform_indices = @transform_2, window_bounds = array<i64: 1, 128, 64>}, {transform_indices = @transform_3, window_bounds = array<i64: 1, 128, 64>}, {transform_indices = @transform_4, window_bounds = array<i64: 1, 128, 128>}]} {
    %c0 = arith.constant 0 : index
    %c0_0 = arith.constant 0 : index
    %c0_1 = arith.constant 0 : index
    %0 = vector.load %arg2[%c0, %c0_0, %c0_1] : memref<1x128x64xf32, #tpu.memory_space<vmem>>, vector<1x128x64xf32>
    %1 = vector.shape_cast %0 : vector<1x128x64xf32> to vector<128x64xf32>
    %cst = arith.constant 1.250000e-01 : f32
    %2 = vector.broadcast %cst : f32 to vector<128x64xf32>
    %3 = arith.mulf %1, %2 : vector<128x64xf32>
    %c0_2 = arith.constant 0 : index
    %c0_3 = arith.constant 0 : index
    %c0_4 = arith.constant 0 : index
    %4 = vector.load %arg3[%c0_2, %c0_3, %c0_4] : memref<1x128x64xf32, #tpu.memory_space<vmem>>, vector<1x128x64xf32>
    %5 = vector.shape_cast %4 : vector<1x128x64xf32> to vector<128x64xf32>
    %c0_5 = arith.constant 0 : index
    %c0_6 = arith.constant 0 : index
    %c0_7 = arith.constant 0 : index
    %6 = vector.load %arg4[%c0_5, %c0_6, %c0_7] : memref<1x128x64xf32, #tpu.memory_space<vmem>>, vector<1x128x64xf32>
    %7 = vector.shape_cast %6 : vector<1x128x64xf32> to vector<128x64xf32>
    %cst_8 = arith.constant dense<0.000000e+00> : vector<128x128xf32>
    %8 = tpu.matmul %3, %5, %cst_8 {dimension_numbers = #tpu.dot_dimension_numbers<[1], [1], [0], [0], [0, 0, 1, 0], [], []>} : vector<128x64xf32>, vector<128x64xf32>, vector<128x128xf32> -> vector<128x128xf32>
    %cst_9 = arith.constant dense<0xFF800000> : vector<128xf32>
    %9 = vector.multi_reduction <maximumf>, %8, %cst_9 [1] : vector<128x128xf32> to vector<128xf32>
    %10 = vector.shape_cast %9 : vector<128xf32> to vector<128x1xf32>
    %11 = vector.broadcast %10 : vector<128x1xf32> to vector<128x128xf32>
    %12 = arith.subf %8, %11 : vector<128x128xf32>
    %13 = math.exp %12 : vector<128x128xf32>
    %cst_10 = arith.constant dense<0.000000e+00> : vector<128xf32>
    %14 = vector.multi_reduction <add>, %13, %cst_10 [1] : vector<128x128xf32> to vector<128xf32>
    %15 = vector.shape_cast %14 : vector<128xf32> to vector<128x1xf32>
    %cst_11 = arith.constant 1.000000e+00 : f32
    %16 = vector.broadcast %cst_11 : f32 to vector<128x1xf32>
    %17 = arith.divf %16, %15 : vector<128x1xf32>
    %18 = vector.broadcast %17 : vector<128x1xf32> to vector<128x128xf32>
    %19 = arith.mulf %13, %18 : vector<128x128xf32>
    %c0_12 = arith.constant 0 : index
    %c0_13 = arith.constant 0 : index
    %c0_14 = arith.constant 0 : index
    %20 = vector.load %arg6[%c0_12, %c0_13, %c0_14] : memref<1x128x128xf32, #tpu.memory_space<vmem>>, vector<1x128x128xf32>
    %21 = vector.shape_cast %20 : vector<1x128x128xf32> to vector<128x128xf32>
    %22 = vector.shape_cast %19 : vector<128x128xf32> to vector<1x128x128xf32>
    tpu.vector_store %arg6[%c0_12, %c0_13, %c0_14], %22 {strides = array<i32>} : memref<1x128x128xf32, #tpu.memory_space<vmem>>, vector<1x128x128xf32>,
    %cst_15 = arith.constant dense<0.000000e+00> : vector<128x64xf32>
    %23 = tpu.matmul %19, %7, %cst_15 {dimension_numbers = #tpu.dot_dimension_numbers<[1], [0], [0], [1], [0, 0, 1, 1], [], []>} : vector<128x128xf32>, vector<128x64xf32>, vector<128x64xf32> -> vector<128x64xf32>
    %c0_16 = arith.constant 0 : index
    %c0_17 = arith.constant 0 : index
    %c0_18 = arith.constant 0 : index
    %24 = vector.load %arg5[%c0_16, %c0_17, %c0_18] : memref<1x128x64xf32, #tpu.memory_space<vmem>>, vector<1x128x64xf32>
    %25 = vector.shape_cast %24 : vector<1x128x64xf32> to vector<128x64xf32>
    %26 = vector.shape_cast %23 : vector<128x64xf32> to vector<1x128x64xf32>
    tpu.vector_store %arg5[%c0_16, %c0_17, %c0_18], %26 {strides = array<i32>} : memref<1x128x64xf32, #tpu.memory_space<vmem>>, vector<1x128x64xf32>,
    return
  }
  func.func @transform_0(%arg0: i32, %arg1: i32) -> (i32, i32, i32) {
    %c0_i32 = arith.constant 0 : i32
    %c0_i32_0 = arith.constant 0 : i32
    return %arg0, %arg1, %c0_i32 : i32, i32, i32
  }
  func.func @transform_1(%arg0: i32, %arg1: i32) -> (i32, i32, i32) {
    %c0_i32 = arith.constant 0 : i32
    %c0_i32_0 = arith.constant 0 : i32
    %c0_i32_1 = arith.constant 0 : i32
    return %arg0, %c0_i32, %c0_i32_0 : i32, i32, i32
  }
  func.func @transform_2(%arg0: i32, %arg1: i32) -> (i32, i32, i32) {
    %c0_i32 = arith.constant 0 : i32
    %c0_i32_0 = arith.constant 0 : i32
    %c0_i32_1 = arith.constant 0 : i32
    return %arg0, %c0_i32, %c0_i32_0 : i32, i32, i32
  }
  func.func @transform_3(%arg0: i32, %arg1: i32) -> (i32, i32, i32) {
    %c0_i32 = arith.constant 0 : i32
    %c0_i32_0 = arith.constant 0 : i32
    return %arg0, %arg1, %c0_i32 : i32, i32, i32
  }
  func.func @transform_4(%arg0: i32, %arg1: i32) -> (i32, i32, i32) {
    %c0_i32 = arith.constant 0 : i32
    %c0_i32_0 = arith.constant 0 : i32
    return %arg0, %arg1, %c0_i32 : i32, i32, i32
  }
}

</mosaic_0001>

<llo_original>
// kernel: tpu_custom_call.1
$region0: #{tpu_custom_call.1}
  #allocation0 [shape = 'u32[]', space=smem, size = 0x4, offset = 0x4, fixed_abs, tag = 'smem constant byte address 0x4 - core index']
  #allocation1 [shape = 'u32[144,128]{1,0:T(1,128)}', space=vmem, size = 0x12000, scoped, tag = 'internal scratch']
  %s0 = inlined_call_operand.vmem [shape: f32[2,128,64], index: 0, kind: input, shape index: {}]
  %s1 = inlined_call_operand.vmem [shape: f32[2,128,64], index: 1, kind: input, shape index: {}]
  %s2 = inlined_call_operand.vmem [shape: f32[2,128,64], index: 2, kind: input, shape index: {}]
  %s3 = inlined_call_operand.vmem [shape: f32[2,128,64], index: 3, kind: output, shape index: {0}]
  %s4 = inlined_call_operand.hbm [shape: f32[2,128,128], index: 4, kind: output, shape index: {1}]
  %5 = xla_tuple %s3, %s4
  %s6 = sld [smem:[#allocation0]]
  $region53: #{tpu_custom_call.1} parent=0
    _
  %s8 = ssub.s32 1, %s6
  %s9 = scalar_select 0, %s8, %s6
  $region1: #{tpu_custom_call.1} parent=0
    #allocation2 [shape = 'u8[131072]{0}', space=vmem, size = 0x20000, scoped, tag = 'output window, operand 1']
    #allocation3 [shape = 's32[2]{0}', space=sflag, size = 0x8, scoped, tag = 'scoped memory for tpu_custom_call.1']
    %10 = vsyncpa [#allocation3], 0
    %s11 = scalar_lea.sflag [#allocation3], 1
    %12 = vsyncpa %s11, 0
    loop: start=0, step=1, limit=4
    $region2: #{tpu_custom_call.1} parent=1 // loop_pre_header
      _
    $region3: #{tpu_custom_call.1} parent=1 // loop_header
      %s14 = sphi 0, %s18
      %p15 = scmp.ge.s32.totalorder %s14, 4
      %s21 = sphi 0, %s33
      %s22 = sphi 0, %s29
      %s23 = sphi 0, %s21
      %s24 = sphi 0, %s22
      %s25 = sphi 0, %s23
      %s26 = sphi 0, %s24
      %s38 = sphi 0, %s40
      %s41 = sphi 0, %s38
      %s42 = sphi 0, %s41
      %s58 = sphi 0, %s42
      %s64 = sphi 0, %s66
      %s67 = sphi 0, %s64
      %s68 = sphi 0, %s67
      %s84 = sphi 0, %s68
      %s90 = sphi 0, %s92
      %s93 = sphi 0, %s90
      %s94 = sphi 0, %s93
      %s110 = sphi 0, %s94
      %s118 = sphi 0, %s120
      %s121 = sphi 0, %s118
      %s122 = sphi 0, %s121
      %s138 = sphi 0, %s122
      %s146 = sphi 0, %s148
      %s149 = sphi 0, %s146
      %s150 = sphi 0, %s149
      %s166 = sphi 0, %s150
    $region4: #{tpu_custom_call.1} parent=1 // loop_header_branch
      %17 = sbr.rel (%p15) target = $region8
    $region5: #{tpu_custom_call.1} parent=1 // loop_body
      %s19 = ssub.s32 %s14, 1
      %s20 = ssub.s32 %s14, 2
      %s27 = sadd.s32 1, %s22
      %p28 = scmp.ge.s32.totalorder %s27, 1
      %s29 = scalar_select %p28, 0, %s27
      %s30 = sadd.s32 1, %s21
      %s31 = scalar_select %p28, %s30, %s21
      %p32 = scmp.ge.s32.totalorder %s31, 2
      %s33 = scalar_select %p32, 0, %s31
      %s34 = ssub.s32 %s21, %s33
      %s35 = ssub.s32 %s22, %s29
      %s36 = sor.u32 %s34, %s35
      %p37 = scmp.eq.s32.totalorder %s36, 0
      %s39 = sadd.s32 %s38, 1
      %s40 = scalar_select %p37, %s38, %s39
      %p43 = pneg %p37
      %p44 = scmp.eq.s32.totalorder %s14, 1
      %p45 = por %p43, %p44
      %p46 = scmp.ne.s32.totalorder %s38, %s41
      %p47 = scmp.eq.s32.totalorder %s14, 0
      %p48 = por %p46, %p47
      %p49 = scmp.ne.s32.totalorder %s38, %s41
      %p50 = scmp.eq.s32.totalorder %s19, 1
      %p51 = por %p49, %p50
      %p52 = scmp.ne.s32.totalorder %s41, %s42
      %p53 = scmp.eq.s32.totalorder %s19, 0
      %p54 = por %p52, %p53
      %p55 = scmp.ne.s32.totalorder %s41, %s42
      %p56 = scmp.eq.s32.totalorder %s20, 1
      %p57 = por %p55, %p56
      %p59 = scmp.ne.s32.totalorder %s42, %s58
      %p60 = scmp.eq.s32.totalorder %s20, 0
      %p61 = por %p59, %p60
      %s62 = ssub.s32 %s21, %s33
      %p63 = scmp.eq.s32.totalorder %s62, 0
      %s65 = sadd.s32 %s64, 1
      %s66 = scalar_select %p63, %s64, %s65
      %p69 = pneg %p63
      %p70 = scmp.eq.s32.totalorder %s14, 1
      %p71 = por %p69, %p70
      %p72 = scmp.ne.s32.totalorder %s64, %s67
      %p73 = scmp.eq.s32.totalorder %s14, 0
      %p74 = por %p72, %p73
      %p75 = scmp.ne.s32.totalorder %s64, %s67
      %p76 = scmp.eq.s32.totalorder %s19, 1
      %p77 = por %p75, %p76
      %p78 = scmp.ne.s32.totalorder %s67, %s68
      %p79 = scmp.eq.s32.totalorder %s19, 0
      %p80 = por %p78, %p79
      %p81 = scmp.ne.s32.totalorder %s67, %s68
      %p82 = scmp.eq.s32.totalorder %s20, 1
      %p83 = por %p81, %p82
      %p85 = scmp.ne.s32.totalorder %s68, %s84
      %p86 = scmp.eq.s32.totalorder %s20, 0
      %p87 = por %p85, %p86
      %s88 = ssub.s32 %s21, %s33
      %p89 = scmp.eq.s32.totalorder %s88, 0
      %s91 = sadd.s32 %s90, 1
      %s92 = scalar_select %p89, %s90, %s91
      %p95 = pneg %p89
      %p96 = scmp.eq.s32.totalorder %s14, 1
      %p97 = por %p95, %p96
      %p98 = scmp.ne.s32.totalorder %s90, %s93
      %p99 = scmp.eq.s32.totalorder %s14, 0
      %p100 = por %p98, %p99
      %p101 = scmp.ne.s32.totalorder %s90, %s93
      %p102 = scmp.eq.s32.totalorder %s19, 1
      %p103 = por %p101, %p102
      %p104 = scmp.ne.s32.totalorder %s93, %s94
      %p105 = scmp.eq.s32.totalorder %s19, 0
      %p106 = por %p104, %p105
      %p107 = scmp.ne.s32.totalorder %s93, %s94
      %p108 = scmp.eq.s32.totalorder %s20, 1
      %p109 = por %p107, %p108
      %p111 = scmp.ne.s32.totalorder %s94, %s110
      %p112 = scmp.eq.s32.totalorder %s20, 0
      %p113 = por %p111, %p112
      %s114 = ssub.s32 %s21, %s33
      %s115 = ssub.s32 %s22, %s29
      %s116 = sor.u32 %s114, %s115
      %p117 = scmp.eq.s32.totalorder %s116, 0
      %s119 = sadd.s32 %s118, 1
      %s120 = scalar_select %p117, %s118, %s119
      %p123 = pneg %p117
      %p124 = scmp.eq.s32.totalorder %s14, 1
      %p125 = por %p123, %p124
      %p126 = scmp.ne.s32.totalorder %s118, %s121
      %p127 = scmp.eq.s32.totalorder %s14, 0
      %p128 = por %p126, %p127
      %p129 = scmp.ne.s32.totalorder %s118, %s121
      %p130 = scmp.eq.s32.totalorder %s19, 1
      %p131 = por %p129, %p130
      %p132 = scmp.ne.s32.totalorder %s121, %s122
      %p133 = scmp.eq.s32.totalorder %s19, 0
      %p134 = por %p132, %p133
      %p135 = scmp.ne.s32.totalorder %s121, %s122
      %p136 = scmp.eq.s32.totalorder %s20, 1
      %p137 = por %p135, %p136
      %p139 = scmp.ne.s32.totalorder %s122, %s138
      %p140 = scmp.eq.s32.totalorder %s20, 0
      %p141 = por %p139, %p140
      %s142 = ssub.s32 %s21, %s33
      %s143 = ssub.s32 %s22, %s29
      %s144 = sor.u32 %s142, %s143
      %p145 = scmp.eq.s32.totalorder %s144, 0
      %s147 = sadd.s32 %s146, 1
      %s148 = scalar_select %p145, %s146, %s147
      %p151 = pneg %p145
      %p152 = scmp.eq.s32.totalorder %s14, 1
      %p153 = por %p151, %p152
      %p154 = scmp.ne.s32.totalorder %s146, %s149
      %p155 = scmp.eq.s32.totalorder %s14, 0
      %p156 = por %p154, %p155
      %p157 = scmp.ne.s32.totalorder %s146, %s149
      %p158 = scmp.eq.s32.totalorder %s19, 1
      %p159 = por %p157, %p158
      %p160 = scmp.ne.s32.totalorder %s149, %s150
      %p161 = scmp.eq.s32.totalorder %s19, 0
      %p162 = por %p160, %p161
      %p163 = scmp.ne.s32.totalorder %s149, %s150
      %p164 = scmp.eq.s32.totalorder %s20, 1
      %p165 = por %p163, %p164
      %p167 = scmp.ne.s32.totalorder %s150, %s166
      %p168 = scmp.eq.s32.totalorder %s20, 0
      %p169 = por %p167, %p168
      %p170 = scmp.le.s32.totalorder 1, %s14
      %p171 = scmp.lt.s32.totalorder %s14, 3
      %p172 = pnand %p170, %p171
      %p173 = pneg %p172
      // Predicated region
      $region9: #{tpu_custom_call.1} parent=5 // pred_check
        _
      $region10: #{tpu_custom_call.1} parent=5 // pred_check_branch
        %175 = sbr.rel (%p172) target = $region12
      $region11: #{tpu_custom_call.1} parent=5 // pred_region
        %s176 = ssub.s32 %s14, 1
        // Predicated region
        $region13: #{tpu_custom_call.1} parent=11 // pred_check
          %p177 = pneg %p80
        $region14: #{tpu_custom_call.1} parent=11 // pred_check_branch
          %179 = sbr.rel (%p177) target = $region16
        $region15: #{tpu_custom_call.1} parent=11 // pred_region
          %p180 = scmp.lt.s32.totalorder %s23, 1
          %s181 = scalar_select %p180, %s23, 1
          %s182 = smul.addr %s181, 16
          %s183 = smul.addr %s182, 8
          %s184 = scalar_lea.vmem %s1, %s183
        $region16: #{tpu_custom_call.1} parent=11 // pred_fallthru
          _
        // Predicated region
        $region17: #{tpu_custom_call.1} parent=11 // pred_check
          %p185 = pneg %p106
        $region18: #{tpu_custom_call.1} parent=11 // pred_check_branch
          %187 = sbr.rel (%p185) target = $region20
        $region19: #{tpu_custom_call.1} parent=11 // pred_region
          %p188 = scmp.lt.s32.totalorder %s23, 1
          %s189 = scalar_select %p188, %s23, 1
          %s190 = smul.addr %s189, 16
          %s191 = smul.addr %s190, 8
          %s192 = scalar_lea.vmem %s2, %s191
        $region20: #{tpu_custom_call.1} parent=11 // pred_fallthru
          _
      $region12: #{tpu_custom_call.1} parent=5 // pred_fallthru
        _
      %p193 = scmp.lt.s32.totalorder %s14, 2
      // Predicated region
      $region21: #{tpu_custom_call.1} parent=5 // pred_check
        %p194 = pneg %p193
      $region22: #{tpu_custom_call.1} parent=5 // pred_check_branch
        %196 = sbr.rel (%p194) target = $region24
      $region23: #{tpu_custom_call.1} parent=5 // pred_region
        // Predicated region
        $region25: #{tpu_custom_call.1} parent=23 // pred_check
          %p197 = pneg %p48
        $region26: #{tpu_custom_call.1} parent=23 // pred_check_branch
          %199 = sbr.rel (%p197) target = $region28
        $region27: #{tpu_custom_call.1} parent=23 // pred_region
          %s200 = smul.u32 16, %s22
          %p201 = scmp.lt.s32.totalorder %s21, 1
          %s202 = scalar_select %p201, %s21, 1
          %p203 = scmp.lt.s32.totalorder %s200, 15
          %s204 = scalar_select %p203, %s200, 15
          %s205 = smul.addr %s202, 16
          %s206 = sadd.s32 %s204, %s205
          %s207 = smul.addr %s206, 8
          %s208 = scalar_lea.vmem %s0, %s207
          %s209 = smul.u32 16, %s22
        $region28: #{tpu_custom_call.1} parent=23 // pred_fallthru
          _
      $region24: #{tpu_custom_call.1} parent=5 // pred_fallthru
        _
      %p210 = scmp.le.s32.totalorder 1, %s14
      %p211 = scmp.lt.s32.totalorder %s14, 3
      %p212 = pnand %p210, %p211
      %p213 = pneg %p212
      // Predicated region
      $region29: #{tpu_custom_call.1} parent=5 // pred_check
        _
      $region30: #{tpu_custom_call.1} parent=5 // pred_check_branch
        %215 = sbr.rel (%p212) target = $region32
      $region31: #{tpu_custom_call.1} parent=5 // pred_region
        %s216 = ssub.s32 %s14, 1
        %s217 = smul.u32 16, %s24
        %p218 = scmp.lt.s32.totalorder %s23, 1
        %s219 = scalar_select %p218, %s23, 1
        %p220 = scmp.lt.s32.totalorder %s217, 15
        %s221 = scalar_select %p220, %s217, 15
        %s222 = smul.addr %s219, 16
        %s223 = sadd.s32 %s221, %s222
        %s224 = smul.addr %s223, 8
        %s225 = scalar_lea.vmem %s0, %s224
        %p226 = pneg %p54
        %p227 = pneg %p51
        %p228 = scmp.lt.s32.totalorder %s23, 1
        %s229 = scalar_select %p228, %s23, 1
        %s230 = smul.addr %s229, 16
        %s231 = smul.addr %s230, 8
        %s232 = scalar_lea.vmem %s1, %s231
        %p233 = pneg %p80
        %p234 = pneg %p77
        %p235 = scmp.lt.s32.totalorder %s23, 1
        %s236 = scalar_select %p235, %s23, 1
        %s237 = smul.addr %s236, 16
        %s238 = smul.addr %s237, 8
        %s239 = scalar_lea.vmem %s2, %s238
        %p240 = pneg %p106
        %p241 = pneg %p103
        %p242 = pneg %p134
        %p243 = pneg %p131
        %s244 = smul.u32 16, %s24
        %p245 = scmp.lt.s32.totalorder %s23, 1
        %s246 = scalar_select %p245, %s23, 1
        %p247 = scmp.lt.s32.totalorder %s244, 15
        %s248 = scalar_select %p247, %s244, 15
        %s249 = smul.addr %s246, 16
        %s250 = sadd.s32 %s248, %s249
        %s251 = smul.addr %s250, 8
        %s252 = scalar_lea.vmem %s3, %s251
        %p253 = pneg %p162
        %p254 = pneg %p159
        %s255 = sand.u32 %s149, 1
        %s256 = scalar_lea.sflag [#allocation3], %s255
        %s257 = sand.u32 %s149, 1
        %s258 = smul.addr %s257, 128
        %s259 = scalar_lea.vmem [#allocation2], %s258
        %s260 = smul.u32 16, %s24
        %p261 = scmp.lt.s32.totalorder %s23, 1
        %s262 = scalar_select %p261, %s23, 1
        %p263 = scmp.lt.s32.totalorder %s260, 15
        %s264 = scalar_select %p263, %s260, 15
        %s265 = smul.addr %s262, 16
        %s266 = sadd.s32 %s264, %s265
        %s267 = smul.addr %s266, 8
        %s268 = scalar_lea.vmem %s0, %s267
        %s269 = smul.u32 16, %s24
        %p270 = scmp.lt.s32.totalorder %s23, 1
        %s271 = scalar_select %p270, %s23, 1
        %s272 = smul.addr %s271, 16
        %s273 = smul.addr %s272, 8
        %s274 = scalar_lea.vmem %s1, %s273
        %p275 = scmp.lt.s32.totalorder %s23, 1
        %s276 = scalar_select %p275, %s23, 1
        %s277 = smul.addr %s276, 16
        %s278 = smul.addr %s277, 8
        %s279 = scalar_lea.vmem %s2, %s278
        %s280 = smul.u32 16, %s24
        %p281 = scmp.lt.s32.totalorder %s23, 1
        %s282 = scalar_select %p281, %s23, 1
        %p283 = scmp.lt.s32.totalorder %s280, 15
        %s284 = scalar_select %p283, %s280, 15
        %s285 = smul.addr %s282, 16
        %s286 = sadd.s32 %s284, %s285
        %s287 = smul.addr %s286, 8
        %s288 = scalar_lea.vmem %s3, %s287
        %s289 = smul.u32 16, %s24
        %s290 = smul.u32 16, %s24
        %v291 = vld [vmem:[%s268] sm:$0xff]
        %v292 = vld [vmem:[%s268 + $0x8] sm:$0xff]
        %v293 = vld [vmem:[%s268 + $0x10] sm:$0xff]
        %v294 = vld [vmem:[%s268 + $0x18] sm:$0xff]
        %v295 = vld [vmem:[%s268 + $0x20] sm:$0xff]
        %v296 = vld [vmem:[%s268 + $0x28] sm:$0xff]
        %v297 = vld [vmem:[%s268 + $0x30] sm:$0xff]
        %v298 = vld [vmem:[%s268 + $0x38] sm:$0xff]
        %v299 = vld [vmem:[%s268 + $0x40] sm:$0xff]
        %v300 = vld [vmem:[%s268 + $0x48] sm:$0xff]
        %v301 = vld [vmem:[%s268 + $0x50] sm:$0xff]
        %v302 = vld [vmem:[%s268 + $0x58] sm:$0xff]
        %v303 = vld [vmem:[%s268 + $0x60] sm:$0xff]
        %v304 = vld [vmem:[%s268 + $0x68] sm:$0xff]
        %v305 = vld [vmem:[%s268 + $0x70] sm:$0xff]
        %v306 = vld [vmem:[%s268 + $0x78] sm:$0xff]
        %v307 = vmul.f32 %v291, 0.125
        %v308 = vmul.f32 %v292, 0.125
        %v309 = vmul.f32 %v293, 0.125
        %v310 = vmul.f32 %v294, 0.125
        %v311 = vmul.f32 %v295, 0.125
        %v312 = vmul.f32 %v296, 0.125
        %v313 = vmul.f32 %v297, 0.125
        %v314 = vmul.f32 %v298, 0.125
        %v315 = vmul.f32 %v299, 0.125
        %v316 = vmul.f32 %v300, 0.125
        %v317 = vmul.f32 %v301, 0.125
        %v318 = vmul.f32 %v302, 0.125
        %v319 = vmul.f32 %v303, 0.125
        %v320 = vmul.f32 %v304, 0.125
        %v321 = vmul.f32 %v305, 0.125
        %v322 = vmul.f32 %v306, 0.125
        %v323 = vld [vmem:[%s274] sm:$0xff]
        %v324 = vld [vmem:[%s274 + $0x8] sm:$0xff]
        %v325 = vld [vmem:[%s274 + $0x10] sm:$0xff]
        %v326 = vld [vmem:[%s274 + $0x18] sm:$0xff]
        %v327 = vld [vmem:[%s274 + $0x20] sm:$0xff]
        %v328 = vld [vmem:[%s274 + $0x28] sm:$0xff]
        %v329 = vld [vmem:[%s274 + $0x30] sm:$0xff]
        %v330 = vld [vmem:[%s274 + $0x38] sm:$0xff]
        %v331 = vld [vmem:[%s274 + $0x40] sm:$0xff]
        %v332 = vld [vmem:[%s274 + $0x48] sm:$0xff]
        %v333 = vld [vmem:[%s274 + $0x50] sm:$0xff]
        %v334 = vld [vmem:[%s274 + $0x58] sm:$0xff]
        %v335 = vld [vmem:[%s274 + $0x60] sm:$0xff]
        %v336 = vld [vmem:[%s274 + $0x68] sm:$0xff]
        %v337 = vld [vmem:[%s274 + $0x70] sm:$0xff]
        %v338 = vld [vmem:[%s274 + $0x78] sm:$0xff]
        %v339 = vld [vmem:[%s279] sm:$0xff]
        %v340 = vld [vmem:[%s279 + $0x8] sm:$0xff]
        %v341 = vld [vmem:[%s279 + $0x10] sm:$0xff]
        %v342 = vld [vmem:[%s279 + $0x18] sm:$0xff]
        %v343 = vld [vmem:[%s279 + $0x20] sm:$0xff]
        %v344 = vld [vmem:[%s279 + $0x28] sm:$0xff]
        %v345 = vld [vmem:[%s279 + $0x30] sm:$0xff]
        %v346 = vld [vmem:[%s279 + $0x38] sm:$0xff]
        %v347 = vld [vmem:[%s279 + $0x40] sm:$0xff]
        %v348 = vld [vmem:[%s279 + $0x48] sm:$0xff]
        %v349 = vld [vmem:[%s279 + $0x50] sm:$0xff]
        %v350 = vld [vmem:[%s279 + $0x58] sm:$0xff]
        %v351 = vld [vmem:[%s279 + $0x60] sm:$0xff]
        %v352 = vld [vmem:[%s279 + $0x68] sm:$0xff]
        %v353 = vld [vmem:[%s279 + $0x70] sm:$0xff]
        %v354 = vld [vmem:[%s279 + $0x78] sm:$0xff]
        %vm355 = vcmask 523264
        %v357 = vsel %vm355, %v307, 0
        %v360 = vsel %vm355, %v308, 0
        %v363 = vsel %vm355, %v309, 0
        %v366 = vsel %vm355, %v310, 0
        %v369 = vsel %vm355, %v311, 0
        %v372 = vsel %vm355, %v312, 0
        %v375 = vsel %vm355, %v313, 0
        %v378 = vsel %vm355, %v314, 0
        %v381 = vsel %vm355, %v315, 0
        %v384 = vsel %vm355, %v316, 0
        %v387 = vsel %vm355, %v317, 0
        %v390 = vsel %vm355, %v318, 0
        %v393 = vsel %vm355, %v319, 0
        %v396 = vsel %vm355, %v320, 0
        %v399 = vsel %vm355, %v321, 0
        %v402 = vsel %vm355, %v322, 0
        %v405 = vsel %vm355, %v323, 0
        %v408 = vsel %vm355, %v324, 0
        %v411 = vsel %vm355, %v325, 0
        %v414 = vsel %vm355, %v326, 0
        %v417 = vsel %vm355, %v327, 0
        %v420 = vsel %vm355, %v328, 0
        %v423 = vsel %vm355, %v329, 0
        %v426 = vsel %vm355, %v330, 0
        %v429 = vsel %vm355, %v331, 0
        %v432 = vsel %vm355, %v332, 0
        %v435 = vsel %vm355, %v333, 0
        %v438 = vsel %vm355, %v334, 0
        %v441 = vsel %vm355, %v335, 0
        %v444 = vsel %vm355, %v336, 0
        %v447 = vsel %vm355, %v337, 0
        %v450 = vsel %vm355, %v338, 0
        %452 = vmatprep.subr.mxu0 0.0
        %453 = vmatpush1.xpose.msra.mxu0 %v405
        %454 = vmatprep.subr.mxu0 0.0
        %455 = vmatpush1.xpose.msra.mxu0 %v408
        %456 = vmatprep.subr.mxu0 0.0
        %457 = vmatpush1.xpose.msra.mxu0 %v411
        %458 = vmatprep.subr.mxu0 0.0
        %459 = vmatpush1.xpose.msra.mxu0 %v414
        %460 = vmatprep.subr.mxu0 0.0
        %461 = vmatpush1.xpose.msra.mxu0 %v417
        %462 = vmatprep.subr.mxu0 0.0
        %463 = vmatpush1.xpose.msra.mxu0 %v420
        %464 = vmatprep.subr.mxu0 0.0
        %465 = vmatpush1.xpose.msra.mxu0 %v423
        %466 = vmatprep.subr.mxu0 0.0
        %467 = vmatpush1.xpose.msra.mxu0 %v426
        %468 = vmatprep.subr.mxu0 0.0
        %469 = vmatpush1.xpose.msra.mxu0 %v429
        %470 = vmatprep.subr.mxu0 0.0
        %471 = vmatpush1.xpose.msra.mxu0 %v432
        %472 = vmatprep.subr.mxu0 0.0
        %473 = vmatpush1.xpose.msra.mxu0 %v435
        %474 = vmatprep.subr.mxu0 0.0
        %475 = vmatpush1.xpose.msra.mxu0 %v438
        %476 = vmatprep.subr.mxu0 0.0
        %477 = vmatpush1.xpose.msra.mxu0 %v441
        %478 = vmatprep.subr.mxu0 0.0
        %479 = vmatpush1.xpose.msra.mxu0 %v444
        %480 = vmatprep.subr.mxu0 0.0
        %481 = vmatpush1.xpose.msra.mxu0 %v447
        %482 = vmatprep.subr.mxu0 0.0
        %483 = vmatpush1.xpose.msra.mxu0 %v450
        %484 = vmatprep.subr.mxu0 0.0
        %485 = vmatpush1.xpose.msra.mxu0 0.0
        %486 = vmatprep.subr.mxu0 0.0
        %487 = vmatpush1.xpose.msra.mxu0 0.0
        %488 = vmatprep.subr.mxu0 0.0
        %489 = vmatpush1.xpose.msra.mxu0 0.0
        %490 = vmatprep.subr.mxu0 0.0
        %491 = vmatpush1.xpose.msra.mxu0 0.0
        %492 = vmatprep.subr.mxu0 0.0
        %493 = vmatpush1.xpose.msra.mxu0 0.0
        %494 = vmatprep.subr.mxu0 0.0
        %495 = vmatpush1.xpose.msra.mxu0 0.0
        %496 = vmatprep.subr.mxu0 0.0
        %497 = vmatpush1.xpose.msra.mxu0 0.0
        %498 = vmatprep.subr.mxu0 0.0
        %499 = vmatpush1.xpose.msra.mxu0 0.0
        %500 = vmatprep.subr.mxu0 0.0
        %501 = vmatpush1.xpose.msra.mxu0 0.0
        %502 = vmatprep.subr.mxu0 0.0
        %503 = vmatpush1.xpose.msra.mxu0 0.0
        %504 = vmatprep.subr.mxu0 0.0
        %505 = vmatpush1.xpose.msra.mxu0 0.0
        %506 = vmatprep.subr.mxu0 0.0
        %507 = vmatpush1.xpose.msra.mxu0 0.0
        %508 = vmatprep.subr.mxu0 0.0
        %509 = vmatpush1.xpose.msra.mxu0 0.0
        %510 = vmatprep.subr.mxu0 0.0
        %511 = vmatpush1.xpose.msra.mxu0 0.0
        %512 = vmatprep.subr.mxu0 0.0
        %513 = vmatpush1.xpose.msra.mxu0 0.0
        %514 = vmatprep.subr.mxu0 0.0
        %515 = vmatpush1.xpose.msra.mxu0 0.0
        %516 = vmatprep.mubr.f32.mxu0 0.0
        %517 = vmatmul.mubr.f32.gmra.mrb[0].mxu0 %v357
        %v518 = vpop.f32.mrb[0].mxu0
        %v519 = vadd.f32 0.0, %v518
        %v520 = vpop.f32.mrb[0].mxu0
        %521 = vmatprep.mubr.f32.mxu0 0.0
        %522 = vmatmul.mubr.f32.gmra.mrb[0].mxu0 %v360
        %v523 = vpop.f32.mrb[0].mxu0
        %v524 = vadd.f32 0.0, %v523
        %v525 = vpop.f32.mrb[0].mxu0
        %526 = vmatprep.mubr.f32.mxu0 0.0
        %527 = vmatmul.mubr.f32.gmra.mrb[0].mxu0 %v363
        %v528 = vpop.f32.mrb[0].mxu0
        %v529 = vadd.f32 0.0, %v528
        %v530 = vpop.f32.mrb[0].mxu0
        %531 = vmatprep.mubr.f32.mxu0 0.0
        %532 = vmatmul.mubr.f32.gmra.mrb[0].mxu0 %v366
        %v533 = vpop.f32.mrb[0].mxu0
        %v534 = vadd.f32 0.0, %v533
        %v535 = vpop.f32.mrb[0].mxu0
        %536 = vmatprep.mubr.f32.mxu0 0.0
        %537 = vmatmul.mubr.f32.gmra.mrb[0].mxu0 %v369
        %v538 = vpop.f32.mrb[0].mxu0
        %v539 = vadd.f32 0.0, %v538
        %v540 = vpop.f32.mrb[0].mxu0
        %541 = vmatprep.mubr.f32.mxu0 0.0
        %542 = vmatmul.mubr.f32.gmra.mrb[0].mxu0 %v372
        %v543 = vpop.f32.mrb[0].mxu0
        %v544 = vadd.f32 0.0, %v543
        %v545 = vpop.f32.mrb[0].mxu0
        %546 = vmatprep.mubr.f32.mxu0 0.0
        %547 = vmatmul.mubr.f32.gmra.mrb[0].mxu0 %v375
        %v548 = vpop.f32.mrb[0].mxu0
        %v549 = vadd.f32 0.0, %v548
        %v550 = vpop.f32.mrb[0].mxu0
        %551 = vmatprep.mubr.f32.mxu0 0.0
        %552 = vmatmul.mubr.f32.gmra.mrb[0].mxu0 %v378
        %v553 = vpop.f32.mrb[0].mxu0
        %v554 = vadd.f32 0.0, %v553
        %v555 = vpop.f32.mrb[0].mxu0
        %556 = vmatprep.mubr.f32.mxu0 0.0
        %557 = vmatmul.mubr.f32.gmra.mrb[0].mxu0 %v381
        %v558 = vpop.f32.mrb[0].mxu0
        %v559 = vadd.f32 0.0, %v558
        %v560 = vpop.f32.mrb[0].mxu0
        %561 = vmatprep.mubr.f32.mxu0 0.0
        %562 = vmatmul.mubr.f32.gmra.mrb[0].mxu0 %v384
        %v563 = vpop.f32.mrb[0].mxu0
        %v564 = vadd.f32 0.0, %v563
        %v565 = vpop.f32.mrb[0].mxu0
        %566 = vmatprep.mubr.f32.mxu0 0.0
        %567 = vmatmul.mubr.f32.gmra.mrb[0].mxu0 %v387
        %v568 = vpop.f32.mrb[0].mxu0
        %v569 = vadd.f32 0.0, %v568
        %v570 = vpop.f32.mrb[0].mxu0
        %571 = vmatprep.mubr.f32.mxu0 0.0
        %572 = vmatmul.mubr.f32.gmra.mrb[0].mxu0 %v390
        %v573 = vpop.f32.mrb[0].mxu0
        %v574 = vadd.f32 0.0, %v573
        %v575 = vpop.f32.mrb[0].mxu0
        %576 = vmatprep.mubr.f32.mxu0 0.0
        %577 = vmatmul.mubr.f32.gmra.mrb[0].mxu0 %v393
        %v578 = vpop.f32.mrb[0].mxu0
        %v579 = vadd.f32 0.0, %v578
        %v580 = vpop.f32.mrb[0].mxu0
        %581 = vmatprep.mubr.f32.mxu0 0.0
        %582 = vmatmul.mubr.f32.gmra.mrb[0].mxu0 %v396
        %v583 = vpop.f32.mrb[0].mxu0
        %v584 = vadd.f32 0.0, %v583
        %v585 = vpop.f32.mrb[0].mxu0
        %586 = vmatprep.mubr.f32.mxu0 0.0
        %587 = vmatmul.mubr.f32.gmra.mrb[0].mxu0 %v399
        %v588 = vpop.f32.mrb[0].mxu0
        %v589 = vadd.f32 0.0, %v588
        %v590 = vpop.f32.mrb[0].mxu0
        %591 = vmatprep.mubr.f32.mxu0 0.0
        %592 = vmatmul.mubr.f32.gmra.mrb[0].mxu0 %v402
        %v593 = vpop.f32.mrb[0].mxu0
        %v594 = vadd.f32 0.0, %v593
        %v595 = vpop.f32.mrb[0].mxu0
        %596 = vdwg.mxu0
        %597 = vmax.xlane.f32.xlu0 %v519
        %v598 = vpop.xlane.xlu0 %597
        %599 = vmax.xlane.f32.xlu0 %v524
        %v600 = vpop.xlane.xlu0 %599
        %601 = vmax.xlane.f32.xlu0 %v529
        %v602 = vpop.xlane.xlu0 %601
        %603 = vmax.xlane.f32.xlu0 %v534
        %v604 = vpop.xlane.xlu0 %603
        %605 = vmax.xlane.f32.xlu0 %v539
        %v606 = vpop.xlane.xlu0 %605
        %607 = vmax.xlane.f32.xlu0 %v544
        %v608 = vpop.xlane.xlu0 %607
        %609 = vmax.xlane.f32.xlu0 %v549
        %v610 = vpop.xlane.xlu0 %609
        %611 = vmax.xlane.f32.xlu0 %v554
        %v612 = vpop.xlane.xlu0 %611
        %613 = vmax.xlane.f32.xlu0 %v559
        %v614 = vpop.xlane.xlu0 %613
        %615 = vmax.xlane.f32.xlu0 %v564
        %v616 = vpop.xlane.xlu0 %615
        %617 = vmax.xlane.f32.xlu0 %v569
        %v618 = vpop.xlane.xlu0 %617
        %619 = vmax.xlane.f32.xlu0 %v574
        %v620 = vpop.xlane.xlu0 %619
        %621 = vmax.xlane.f32.xlu0 %v579
        %v622 = vpop.xlane.xlu0 %621
        %623 = vmax.xlane.f32.xlu0 %v584
        %v624 = vpop.xlane.xlu0 %623
        %625 = vmax.xlane.f32.xlu0 %v589
        %v626 = vpop.xlane.xlu0 %625
        %627 = vmax.xlane.f32.xlu0 %v594
        %v628 = vpop.xlane.xlu0 %627
        %v629 = vsub.f32 %v519, %v598
        %v630 = vsub.f32 %v524, %v600
        %v631 = vsub.f32 %v529, %v602
        %v632 = vsub.f32 %v534, %v604
        %v633 = vsub.f32 %v539, %v606
        %v634 = vsub.f32 %v544, %v608
        %v635 = vsub.f32 %v549, %v610
        %v636 = vsub.f32 %v554, %v612
        %v637 = vsub.f32 %v559, %v614
        %v638 = vsub.f32 %v564, %v616
        %v639 = vsub.f32 %v569, %v618
        %v640 = vsub.f32 %v574, %v620
        %v641 = vsub.f32 %v579, %v622
        %v642 = vsub.f32 %v584, %v624
        %v643 = vsub.f32 %v589, %v626
        %v644 = vsub.f32 %v594, %v628
        %v645 = vmul.f32 %v629, 1.442695
        %v646 = vpow.pop %v645
        %v647 = vmul.f32 %v630, 1.442695
        %v648 = vpow.pop %v647
        %v649 = vmul.f32 %v631, 1.442695
        %v650 = vpow.pop %v649
        %v651 = vmul.f32 %v632, 1.442695
        %v652 = vpow.pop %v651
        %v653 = vmul.f32 %v633, 1.442695
        %v654 = vpow.pop %v653
        %v655 = vmul.f32 %v634, 1.442695
        %v656 = vpow.pop %v655
        %v657 = vmul.f32 %v635, 1.442695
        %v658 = vpow.pop %v657
        %v659 = vmul.f32 %v636, 1.442695
        %v660 = vpow.pop %v659
        %v661 = vmul.f32 %v637, 1.442695
        %v662 = vpow.pop %v661
        %v663 = vmul.f32 %v638, 1.442695
        %v664 = vpow.pop %v663
        %v665 = vmul.f32 %v639, 1.442695
        %v666 = vpow.pop %v665
        %v667 = vmul.f32 %v640, 1.442695
        %v668 = vpow.pop %v667
        %v669 = vmul.f32 %v641, 1.442695
        %v670 = vpow.pop %v669
        %v671 = vmul.f32 %v642, 1.442695
        %v672 = vpow.pop %v671
        %v673 = vmul.f32 %v643, 1.442695
        %v674 = vpow.pop %v673
        %v675 = vmul.f32 %v644, 1.442695
        %v676 = vpow.pop %v675
        %677 = vadd.xlane.f32.xlu0 %v646
        %v678 = vpop.xlane.xlu0 %677
        %679 = vadd.xlane.f32.xlu0 %v648
        %v680 = vpop.xlane.xlu0 %679
        %681 = vadd.xlane.f32.xlu0 %v650
        %v682 = vpop.xlane.xlu0 %681
        %683 = vadd.xlane.f32.xlu0 %v652
        %v684 = vpop.xlane.xlu0 %683
        %685 = vadd.xlane.f32.xlu0 %v654
        %v686 = vpop.xlane.xlu0 %685
        %687 = vadd.xlane.f32.xlu0 %v656
        %v688 = vpop.xlane.xlu0 %687
        %689 = vadd.xlane.f32.xlu0 %v658
        %v690 = vpop.xlane.xlu0 %689
        %691 = vadd.xlane.f32.xlu0 %v660
        %v692 = vpop.xlane.xlu0 %691
        %693 = vadd.xlane.f32.xlu0 %v662
        %v694 = vpop.xlane.xlu0 %693
        %695 = vadd.xlane.f32.xlu0 %v664
        %v696 = vpop.xlane.xlu0 %695
        %697 = vadd.xlane.f32.xlu0 %v666
        %v698 = vpop.xlane.xlu0 %697
        %699 = vadd.xlane.f32.xlu0 %v668
        %v700 = vpop.xlane.xlu0 %699
        %701 = vadd.xlane.f32.xlu0 %v670
        %v702 = vpop.xlane.xlu0 %701
        %703 = vadd.xlane.f32.xlu0 %v672
        %v704 = vpop.xlane.xlu0 %703
        %705 = vadd.xlane.f32.xlu0 %v674
        %v706 = vpop.xlane.xlu0 %705
        %707 = vadd.xlane.f32.xlu0 %v676
        %v708 = vpop.xlane.xlu0 %707
        %v709 = vrcp.pop %v678
        %v710 = vmul.f32 1.0, %v709
        %v711 = vrcp.pop %v680
        %v712 = vmul.f32 1.0, %v711
        %v713 = vrcp.pop %v682
        %v714 = vmul.f32 1.0, %v713
        %v715 = vrcp.pop %v684
        %v716 = vmul.f32 1.0, %v715
        %v717 = vrcp.pop %v686
        %v718 = vmul.f32 1.0, %v717
        %v719 = vrcp.pop %v688
        %v720 = vmul.f32 1.0, %v719
        %v721 = vrcp.pop %v690
        %v722 = vmul.f32 1.0, %v721
        %v723 = vrcp.pop %v692
        %v724 = vmul.f32 1.0, %v723
        %v725 = vrcp.pop %v694
        %v726 = vmul.f32 1.0, %v725
        %v727 = vrcp.pop %v696
        %v728 = vmul.f32 1.0, %v727
        %v729 = vrcp.pop %v698
        %v730 = vmul.f32 1.0, %v729
        %v731 = vrcp.pop %v700
        %v732 = vmul.f32 1.0, %v731
        %v733 = vrcp.pop %v702
        %v734 = vmul.f32 1.0, %v733
        %v735 = vrcp.pop %v704
        %v736 = vmul.f32 1.0, %v735
        %v737 = vrcp.pop %v706
        %v738 = vmul.f32 1.0, %v737
        %v739 = vrcp.pop %v708
        %v740 = vmul.f32 1.0, %v739
        %v741 = vmul.f32 %v646, %v710
        %v742 = vmul.f32 %v648, %v712
        %v743 = vmul.f32 %v650, %v714
        %v744 = vmul.f32 %v652, %v716
        %v745 = vmul.f32 %v654, %v718
        %v746 = vmul.f32 %v656, %v720
        %v747 = vmul.f32 %v658, %v722
        %v748 = vmul.f32 %v660, %v724
        %v749 = vmul.f32 %v662, %v726
        %v750 = vmul.f32 %v664, %v728
        %v751 = vmul.f32 %v666, %v730
        %v752 = vmul.f32 %v668, %v732
        %v753 = vmul.f32 %v670, %v734
        %v754 = vmul.f32 %v672, %v736
        %v755 = vmul.f32 %v674, %v738
        %v756 = vmul.f32 %v676, %v740
        %757 = vst [vmem:[%s259] sm:$0xff] %v741
        %758 = vst [vmem:[%s259 + $0x8] sm:$0xff] %v742
        %759 = vst [vmem:[%s259 + $0x10] sm:$0xff] %v743
        %760 = vst [vmem:[%s259 + $0x18] sm:$0xff] %v744
        %761 = vst [vmem:[%s259 + $0x20] sm:$0xff] %v745
        %762 = vst [vmem:[%s259 + $0x28] sm:$0xff] %v746
        %763 = vst [vmem:[%s259 + $0x30] sm:$0xff] %v747
        %764 = vst [vmem:[%s259 + $0x38] sm:$0xff] %v748
        %765 = vst [vmem:[%s259 + $0x40] sm:$0xff] %v749
        %766 = vst [vmem:[%s259 + $0x48] sm:$0xff] %v750
        %767 = vst [vmem:[%s259 + $0x50] sm:$0xff] %v751
        %768 = vst [vmem:[%s259 + $0x58] sm:$0xff] %v752
        %769 = vst [vmem:[%s259 + $0x60] sm:$0xff] %v753
        %770 = vst [vmem:[%s259 + $0x68] sm:$0xff] %v754
        %771 = vst [vmem:[%s259 + $0x70] sm:$0xff] %v755
        %772 = vst [vmem:[%s259 + $0x78] sm:$0xff] %v756
        %773 = vmatprep.subr.mxu0 0.0
        %774 = vmatpush1.msra.mxu0 %v339
        %775 = vmatprep.subr.mxu0 0.0
        %776 = vmatpush1.msra.mxu0 %v340
        %777 = vmatprep.subr.mxu0 0.0
        %778 = vmatpush1.msra.mxu0 %v341
        %779 = vmatprep.subr.mxu0 0.0
        %780 = vmatpush1.msra.mxu0 %v342
        %781 = vmatprep.subr.mxu0 0.0
        %782 = vmatpush1.msra.mxu0 %v343
        %783 = vmatprep.subr.mxu0 0.0
        %784 = vmatpush1.msra.mxu0 %v344
        %785 = vmatprep.subr.mxu0 0.0
        %786 = vmatpush1.msra.mxu0 %v345
        %787 = vmatprep.subr.mxu0 0.0
        %788 = vmatpush1.msra.mxu0 %v346
        %789 = vmatprep.subr.mxu0 0.0
        %790 = vmatpush1.msra.mxu0 %v347
        %791 = vmatprep.subr.mxu0 0.0
        %792 = vmatpush1.msra.mxu0 %v348
        %793 = vmatprep.subr.mxu0 0.0
        %794 = vmatpush1.msra.mxu0 %v349
        %795 = vmatprep.subr.mxu0 0.0
        %796 = vmatpush1.msra.mxu0 %v350
        %797 = vmatprep.subr.mxu0 0.0
        %798 = vmatpush1.msra.mxu0 %v351
        %799 = vmatprep.subr.mxu0 0.0
        %800 = vmatpush1.msra.mxu0 %v352
        %801 = vmatprep.subr.mxu0 0.0
        %802 = vmatpush1.msra.mxu0 %v353
        %803 = vmatprep.subr.mxu0 0.0
        %804 = vmatpush1.msra.mxu0 %v354
        %805 = vmatprep.subr.mxu0 0.0
        %806 = vmatpush1.msra.mxu0 0.0
        %807 = vmatprep.subr.mxu0 0.0
        %808 = vmatpush1.msra.mxu0 0.0
        %809 = vmatprep.subr.mxu0 0.0
        %810 = vmatpush1.msra.mxu0 0.0
        %811 = vmatprep.subr.mxu0 0.0
        %812 = vmatpush1.msra.mxu0 0.0
        %813 = vmatprep.subr.mxu0 0.0
        %814 = vmatpush1.msra.mxu0 0.0
        %815 = vmatprep.subr.mxu0 0.0
        %816 = vmatpush1.msra.mxu0 0.0
        %817 = vmatprep.subr.mxu0 0.0
        %818 = vmatpush1.msra.mxu0 0.0
        %819 = vmatprep.subr.mxu0 0.0
        %820 = vmatpush1.msra.mxu0 0.0
        %821 = vmatprep.subr.mxu0 0.0
        %822 = vmatpush1.msra.mxu0 0.0
        %823 = vmatprep.subr.mxu0 0.0
        %824 = vmatpush1.msra.mxu0 0.0
        %825 = vmatprep.subr.mxu0 0.0
        %826 = vmatpush1.msra.mxu0 0.0
        %827 = vmatprep.subr.mxu0 0.0
        %828 = vmatpush1.msra.mxu0 0.0
        %829 = vmatprep.subr.mxu0 0.0
        %830 = vmatpush1.msra.mxu0 0.0
        %831 = vmatprep.subr.mxu0 0.0
        %832 = vmatpush1.msra.mxu0 0.0
        %833 = vmatprep.subr.mxu0 0.0
        %834 = vmatpush1.msra.mxu0 0.0
        %835 = vmatprep.subr.mxu0 0.0
        %836 = vmatpush1.msra.mxu0 0.0
        %837 = vmatprep.mubr.f32.mxu0 0.0
        %838 = vmatmul.mubr.f32.gmra.mrb[0].mxu0 %v741
        %v839 = vpop.f32.mrb[0].mxu0
        %v840 = vadd.f32 0.0, %v839
        %v841 = vpop.f32.mrb[0].mxu0
        %842 = vmatprep.mubr.f32.mxu0 0.0
        %843 = vmatmul.mubr.f32.gmra.mrb[0].mxu0 %v742
        %v844 = vpop.f32.mrb[0].mxu0
        %v845 = vadd.f32 0.0, %v844
        %v846 = vpop.f32.mrb[0].mxu0
        %847 = vmatprep.mubr.f32.mxu0 0.0
        %848 = vmatmul.mubr.f32.gmra.mrb[0].mxu0 %v743
        %v849 = vpop.f32.mrb[0].mxu0
        %v850 = vadd.f32 0.0, %v849
        %v851 = vpop.f32.mrb[0].mxu0
        %852 = vmatprep.mubr.f32.mxu0 0.0
        %853 = vmatmul.mubr.f32.gmra.mrb[0].mxu0 %v744
        %v854 = vpop.f32.mrb[0].mxu0
        %v855 = vadd.f32 0.0, %v854
        %v856 = vpop.f32.mrb[0].mxu0
        %857 = vmatprep.mubr.f32.mxu0 0.0
        %858 = vmatmul.mubr.f32.gmra.mrb[0].mxu0 %v745
        %v859 = vpop.f32.mrb[0].mxu0
        %v860 = vadd.f32 0.0, %v859
        %v861 = vpop.f32.mrb[0].mxu0
        %862 = vmatprep.mubr.f32.mxu0 0.0
        %863 = vmatmul.mubr.f32.gmra.mrb[0].mxu0 %v746
        %v864 = vpop.f32.mrb[0].mxu0
        %v865 = vadd.f32 0.0, %v864
        %v866 = vpop.f32.mrb[0].mxu0
        %867 = vmatprep.mubr.f32.mxu0 0.0
        %868 = vmatmul.mubr.f32.gmra.mrb[0].mxu0 %v747
        %v869 = vpop.f32.mrb[0].mxu0
        %v870 = vadd.f32 0.0, %v869
        %v871 = vpop.f32.mrb[0].mxu0
        %872 = vmatprep.mubr.f32.mxu0 0.0
        %873 = vmatmul.mubr.f32.gmra.mrb[0].mxu0 %v748
        %v874 = vpop.f32.mrb[0].mxu0
        %v875 = vadd.f32 0.0, %v874
        %v876 = vpop.f32.mrb[0].mxu0
        %877 = vmatprep.mubr.f32.mxu0 0.0
        %878 = vmatmul.mubr.f32.gmra.mrb[0].mxu0 %v749
        %v879 = vpop.f32.mrb[0].mxu0
        %v880 = vadd.f32 0.0, %v879
        %v881 = vpop.f32.mrb[0].mxu0
        %882 = vmatprep.mubr.f32.mxu0 0.0
        %883 = vmatmul.mubr.f32.gmra.mrb[0].mxu0 %v750
        %v884 = vpop.f32.mrb[0].mxu0
        %v885 = vadd.f32 0.0, %v884
        %v886 = vpop.f32.mrb[0].mxu0
        %887 = vmatprep.mubr.f32.mxu0 0.0
        %888 = vmatmul.mubr.f32.gmra.mrb[0].mxu0 %v751
        %v889 = vpop.f32.mrb[0].mxu0
        %v890 = vadd.f32 0.0, %v889
        %v891 = vpop.f32.mrb[0].mxu0
        %892 = vmatprep.mubr.f32.mxu0 0.0
        %893 = vmatmul.mubr.f32.gmra.mrb[0].mxu0 %v752
        %v894 = vpop.f32.mrb[0].mxu0
        %v895 = vadd.f32 0.0, %v894
        %v896 = vpop.f32.mrb[0].mxu0
        %897 = vmatprep.mubr.f32.mxu0 0.0
        %898 = vmatmul.mubr.f32.gmra.mrb[0].mxu0 %v753
        %v899 = vpop.f32.mrb[0].mxu0
        %v900 = vadd.f32 0.0, %v899
        %v901 = vpop.f32.mrb[0].mxu0
        %902 = vmatprep.mubr.f32.mxu0 0.0
        %903 = vmatmul.mubr.f32.gmra.mrb[0].mxu0 %v754
        %v904 = vpop.f32.mrb[0].mxu0
        %v905 = vadd.f32 0.0, %v904
        %v906 = vpop.f32.mrb[0].mxu0
        %907 = vmatprep.mubr.f32.mxu0 0.0
        %908 = vmatmul.mubr.f32.gmra.mrb[0].mxu0 %v755
        %v909 = vpop.f32.mrb[0].mxu0
        %v910 = vadd.f32 0.0, %v909
        %v911 = vpop.f32.mrb[0].mxu0
        %912 = vmatprep.mubr.f32.mxu0 0.0
        %913 = vmatmul.mubr.f32.gmra.mrb[0].mxu0 %v756
        %v914 = vpop.f32.mrb[0].mxu0
        %v915 = vadd.f32 0.0, %v914
        %v916 = vpop.f32.mrb[0].mxu0
        %917 = vdwg.mxu0
        %918 = vst.msk [vmem:[%s288] sm:$0xff] %vm355, %v840
        %919 = vst.msk [vmem:[%s288 + $0x8] sm:$0xff] %vm355, %v845
        %920 = vst.msk [vmem:[%s288 + $0x10] sm:$0xff] %vm355, %v850
        %921 = vst.msk [vmem:[%s288 + $0x18] sm:$0xff] %vm355, %v855
        %922 = vst.msk [vmem:[%s288 + $0x20] sm:$0xff] %vm355, %v860
        %923 = vst.msk [vmem:[%s288 + $0x28] sm:$0xff] %vm355, %v865
        %924 = vst.msk [vmem:[%s288 + $0x30] sm:$0xff] %vm355, %v870
        %925 = vst.msk [vmem:[%s288 + $0x38] sm:$0xff] %vm355, %v875
        %926 = vst.msk [vmem:[%s288 + $0x40] sm:$0xff] %vm355, %v880
        %927 = vst.msk [vmem:[%s288 + $0x48] sm:$0xff] %vm355, %v885
        %928 = vst.msk [vmem:[%s288 + $0x50] sm:$0xff] %vm355, %v890
        %929 = vst.msk [vmem:[%s288 + $0x58] sm:$0xff] %vm355, %v895
        %930 = vst.msk [vmem:[%s288 + $0x60] sm:$0xff] %vm355, %v900
        %931 = vst.msk [vmem:[%s288 + $0x68] sm:$0xff] %vm355, %v905
        %932 = vst.msk [vmem:[%s288 + $0x70] sm:$0xff] %vm355, %v910
        %933 = vst.msk [vmem:[%s288 + $0x78] sm:$0xff] %vm355, %v915
        %s934 = smul.u32 16, %s24
        %p935 = scmp.lt.s32.totalorder %s23, 1
        %s936 = scalar_select %p935, %s23, 1
        %p937 = scmp.lt.s32.totalorder %s934, 15
        %s938 = scalar_select %p937, %s934, 15
        %s939 = smul.addr %s936, 16
        %s940 = sadd.s32 %s938, %s939
        %s941 = smul.addr %s940, 8
        %s942 = scalar_lea.vmem %s3, %s941
        %s943 = sand.u32 %s149, 1
        %s944 = scalar_lea.sflag [#allocation3], %s943
        %s945 = sand.u32 %s149, 1
        %s946 = smul.addr %s945, 128
        %s947 = scalar_lea.vmem [#allocation2], %s946
        // Predicated region
        $region33: #{tpu_custom_call.1} parent=31 // pred_check
          %p948 = pneg %p131
        $region34: #{tpu_custom_call.1} parent=31 // pred_check_branch
          %950 = sbr.rel (%p948) target = $region36
        $region35: #{tpu_custom_call.1} parent=31 // pred_region
          %s951 = smul.u32 16, %s24
        $region36: #{tpu_custom_call.1} parent=31 // pred_fallthru
          _
        // Predicated region
        $region37: #{tpu_custom_call.1} parent=31 // pred_check
          %p952 = pneg %p159
        $region38: #{tpu_custom_call.1} parent=31 // pred_check_branch
          %954 = sbr.rel (%p952) target = $region40
        $region39: #{tpu_custom_call.1} parent=31 // pred_region
          %s955 = smul.u32 16, %s24
          %s957 = ssub.s32 2048, 2048
          %958 = vsyncadd %s944, %s957
          %s959 = smul.addr %s23, 16
          %s960 = sadd.s32 %s955, %s959
          %s961 = smul.addr %s960, 128
          %s962 = scalar_lea.hbm %s4, %s961
          %s963 = sshll.u32 %s947, 4
          %s964 = int_to_ptr.vmem [resolvable:$true] %s963
          %969 = dma.vmem_to_hbm [thread:$0]  %s964, 2048, %s962, %s944, 128, 128, 8
        $region40: #{tpu_custom_call.1} parent=31 // pred_fallthru
          _
      $region32: #{tpu_custom_call.1} parent=5 // pred_fallthru
        _
      %p970 = scmp.le.s32.totalorder 2, %s14
      // Predicated region
      $region41: #{tpu_custom_call.1} parent=5 // pred_check
        %p971 = pneg %p970
      $region42: #{tpu_custom_call.1} parent=5 // pred_check_branch
        %973 = sbr.rel (%p971) target = $region44
      $region43: #{tpu_custom_call.1} parent=5 // pred_region
        %s974 = ssub.s32 %s14, 2
        // Predicated region
        $region45: #{tpu_custom_call.1} parent=43 // pred_check
          %p975 = pneg %p137
        $region46: #{tpu_custom_call.1} parent=43 // pred_check_branch
          %977 = sbr.rel (%p975) target = $region48
        $region47: #{tpu_custom_call.1} parent=43 // pred_region
          %s978 = smul.u32 16, %s26
          %p979 = scmp.lt.s32.totalorder %s25, 1
          %s980 = scalar_select %p979, %s25, 1
          %p981 = scmp.lt.s32.totalorder %s978, 15
          %s982 = scalar_select %p981, %s978, 15
          %s983 = smul.addr %s980, 16
          %s984 = sadd.s32 %s982, %s983
          %s985 = smul.addr %s984, 8
          %s986 = scalar_lea.vmem %s3, %s985
        $region48: #{tpu_custom_call.1} parent=43 // pred_fallthru
          _
        // Predicated region
        $region49: #{tpu_custom_call.1} parent=43 // pred_check
          %p987 = pneg %p165
        $region50: #{tpu_custom_call.1} parent=43 // pred_check_branch
          %989 = sbr.rel (%p987) target = $region52
        $region51: #{tpu_custom_call.1} parent=43 // pred_region
          %s990 = sand.u32 %s150, 1
          %s991 = scalar_lea.sflag [#allocation3], %s990
          %s992 = sand.u32 %s150, 1
          %s993 = smul.addr %s992, 128
          %s994 = scalar_lea.vmem [#allocation2], %s993
          %995 = dma.done %s991, 2048
        $region52: #{tpu_custom_call.1} parent=43 // pred_fallthru
          _
      $region44: #{tpu_custom_call.1} parent=5 // pred_fallthru
        _
    $region6: #{tpu_custom_call.1} parent=1 // loop_footer
      %s18 = sadd.s32 1, %s14
    $region7: #{tpu_custom_call.1} parent=1 // loop_footer_branch
      %13 = sbr.rel target = $region3
    $region8: #{tpu_custom_call.1} parent=1 // loop_exit
      _
    %996 = vsyncpa [#allocation3], 1
    %s997 = scalar_lea.sflag [#allocation3], 1
    %998 = vsyncpa %s997, 1

// kernel: tpu_custom_call.1
$region0: #{tpu_custom_call.1}
  #allocation0 [shape = 'u32[]', space=smem, size = 0x4, offset = 0x4, fixed_abs, tag = 'smem constant byte address 0x4 - core index']
  #allocation1 [shape = 'u32[144,128]{1,0:T(1,128)}', space=vmem, size = 0x12000, scoped, tag = 'internal scratch']
  %s0 = inlined_call_operand.vmem [shape: f32[2,128,64], index: 0, kind: input, shape index: {}]
  %s1 = inlined_call_operand.vmem [shape: f32[2,128,64], index: 1, kind: input, shape index: {}]
  %s2 = inlined_call_operand.vmem [shape: f32[2,128,64], index: 2, kind: input, shape index: {}]
  %s3 = inlined_call_operand.vmem [shape: f32[2,128,64], index: 3, kind: output, shape index: {0}]
  %s4 = inlined_call_operand.hbm [shape: f32[2,128,128], index: 4, kind: output, shape index: {1}]
  %5 = xla_tuple %s3, %s4
  %s6 = sld [smem:[#allocation0]]
  $region53: #{tpu_custom_call.1} parent=0
    _
  %s8 = ssub.s32 1, %s6
  %s9 = scalar_select 0, %s8, %s6
  $region1: #{tpu_custom_call.1} parent=0
    #allocation2 [shape = 'u8[131072]{0}', space=vmem, size = 0x20000, scoped, tag = 'output window, operand 1']
    #allocation3 [shape = 's32[2]{0}', space=sflag, size = 0x8, scoped, tag = 'scoped memory for tpu_custom_call.1']
    %10 = vsyncpa [#allocation3], 0
    %s11 = scalar_lea.sflag [#allocation3], 1
    %12 = vsyncpa %s11, 0
    loop: start=0, step=1, limit=4
    $region2: #{tpu_custom_call.1} parent=1 // loop_pre_header
      _
    $region3: #{tpu_custom_call.1} parent=1 // loop_header
      %s14 = sphi 0, %s18
      %p15 = scmp.ge.s32.totalorder %s14, 4
      %s21 = sphi 0, %s33
      %s22 = sphi 0, %s29
      %s23 = sphi 0, %s21
      %s24 = sphi 0, %s22
      %s25 = sphi 0, %s23
      %s26 = sphi 0, %s24
      %s38 = sphi 0, %s40
      %s41 = sphi 0, %s38
      %s42 = sphi 0, %s41
      %s58 = sphi 0, %s42
      %s64 = sphi 0, %s66
      %s67 = sphi 0, %s64
      %s68 = sphi 0, %s67
      %s84 = sphi 0, %s68
      %s90 = sphi 0, %s92
      %s93 = sphi 0, %s90
      %s94 = sphi 0, %s93
      %s110 = sphi 0, %s94
      %s118 = sphi 0, %s120
      %s121 = sphi 0, %s118
      %s122 = sphi 0, %s121
      %s138 = sphi 0, %s122
      %s146 = sphi 0, %s148
      %s149 = sphi 0, %s146
      %s150 = sphi 0, %s149
      %s166 = sphi 0, %s150
    $region4: #{tpu_custom_call.1} parent=1 // loop_header_branch
      %17 = sbr.rel (%p15) target = $region8
    $region5: #{tpu_custom_call.1} parent=1 // loop_body
      %s19 = ssub.s32 %s14, 1
      %s20 = ssub.s32 %s14, 2
      %s27 = sadd.s32 1, %s22
      %p28 = scmp.ge.s32.totalorder %s27, 1
      %s29 = scalar_select %p28, 0, %s27
      %s30 = sadd.s32 1, %s21
      %s31 = scalar_select %p28, %s30, %s21
      %p32 = scmp.ge.s32.totalorder %s31, 2
      %s33 = scalar_select %p32, 0, %s31
      %s34 = ssub.s32 %s21, %s33
      %s35 = ssub.s32 %s22, %s29
      %s36 = sor.u32 %s34, %s35
      %p37 = scmp.eq.s32.totalorder %s36, 0
      %s39 = sadd.s32 %s38, 1
      %s40 = scalar_select %p37, %s38, %s39
      %p43 = pneg %p37
      %p44 = scmp.eq.s32.totalorder %s14, 1
      %p45 = por %p43, %p44
      %p46 = scmp.ne.s32.totalorder %s38, %s41
      %p47 = scmp.eq.s32.totalorder %s14, 0
      %p48 = por %p46, %p47
      %p49 = scmp.ne.s32.totalorder %s38, %s41
      %p50 = scmp.eq.s32.totalorder %s19, 1
      %p51 = por %p49, %p50
      %p52 = scmp.ne.s32.totalorder %s41, %s42
      %p53 = scmp.eq.s32.totalorder %s19, 0
      %p54 = por %p52, %p53
      %p55 = scmp.ne.s32.totalorder %s41, %s42
      %p56 = scmp.eq.s32.totalorder %s20, 1
      %p57 = por %p55, %p56
      %p59 = scmp.ne.s32.totalorder %s42, %s58
      %p60 = scmp.eq.s32.totalorder %s20, 0
      %p61 = por %p59, %p60
      %s62 = ssub.s32 %s21, %s33
      %p63 = scmp.eq.s32.totalorder %s62, 0
      %s65 = sadd.s32 %s64, 1
      %s66 = scalar_select %p63, %s64, %s65
      %p69 = pneg %p63
      %p70 = scmp.eq.s32.totalorder %s14, 1
      %p71 = por %p69, %p70
      %p72 = scmp.ne.s32.totalorder %s64, %s67
      %p73 = scmp.eq.s32.totalorder %s14, 0
      %p74 = por %p72, %p73
      %p75 = scmp.ne.s32.totalorder %s64, %s67
      %p76 = scmp.eq.s32.totalorder %s19, 1
      %p77 = por %p75, %p76
      %p78 = scmp.ne.s32.totalorder %s67, %s68
      %p79 = scmp.eq.s32.totalorder %s19, 0
      %p80 = por %p78, %p79
      %p81 = scmp.ne.s32.totalorder %s67, %s68
      %p82 = scmp.eq.s32.totalorder %s20, 1
      %p83 = por %p81, %p82
      %p85 = scmp.ne.s32.totalorder %s68, %s84
      %p86 = scmp.eq.s32.totalorder %s20, 0
      %p87 = por %p85, %p86
      %s88 = ssub.s32 %s21, %s33
      %p89 = scmp.eq.s32.totalorder %s88, 0
      %s91 = sadd.s32 %s90, 1
      %s92 = scalar_select %p89, %s90, %s91
      %p95 = pneg %p89
      %p96 = scmp.eq.s32.totalorder %s14, 1
      %p97 = por %p95, %p96
      %p98 = scmp.ne.s32.totalorder %s90, %s93
      %p99 = scmp.eq.s32.totalorder %s14, 0
      %p100 = por %p98, %p99
      %p101 = scmp.ne.s32.totalorder %s90, %s93
      %p102 = scmp.eq.s32.totalorder %s19, 1
      %p103 = por %p101, %p102
      %p104 = scmp.ne.s32.totalorder %s93, %s94
      %p105 = scmp.eq.s32.totalorder %s19, 0
      %p106 = por %p104, %p105
      %p107 = scmp.ne.s32.totalorder %s93, %s94
      %p108 = scmp.eq.s32.totalorder %s20, 1
      %p109 = por %p107, %p108
      %p111 = scmp.ne.s32.totalorder %s94, %s110
      %p112 = scmp.eq.s32.totalorder %s20, 0
      %p113 = por %p111, %p112
      %s114 = ssub.s32 %s21, %s33
      %s115 = ssub.s32 %s22, %s29
      %s116 = sor.u32 %s114, %s115
      %p117 = scmp.eq.s32.totalorder %s116, 0
      %s119 = sadd.s32 %s118, 1
      %s120 = scalar_select %p117, %s118, %s119
      %p123 = pneg %p117
      %p124 = scmp.eq.s32.totalorder %s14, 1
      %p125 = por %p123, %p124
      %p126 = scmp.ne.s32.totalorder %s118, %s121
      %p127 = scmp.eq.s32.totalorder %s14, 0
      %p128 = por %p126, %p127
      %p129 = scmp.ne.s32.totalorder %s118, %s121
      %p130 = scmp.eq.s32.totalorder %s19, 1
      %p131 = por %p129, %p130
      %p132 = scmp.ne.s32.totalorder %s121, %s122
      %p133 = scmp.eq.s32.totalorder %s19, 0
      %p134 = por %p132, %p133
      %p135 = scmp.ne.s32.totalorder %s121, %s122
      %p136 = scmp.eq.s32.totalorder %s20, 1
      %p137 = por %p135, %p136
      %p139 = scmp.ne.s32.totalorder %s122, %s138
      %p140 = scmp.eq.s32.totalorder %s20, 0
      %p141 = por %p139, %p140
      %s142 = ssub.s32 %s21, %s33
      %s143 = ssub.s32 %s22, %s29
      %s144 = sor.u32 %s142, %s143
      %p145 = scmp.eq.s32.totalorder %s144, 0
      %s147 = sadd.s32 %s146, 1
      %s148 = scalar_select %p145, %s146, %s147
      %p151 = pneg %p145
      %p152 = scmp.eq.s32.totalorder %s14, 1
      %p153 = por %p151, %p152
      %p154 = scmp.ne.s32.totalorder %s146, %s149
      %p155 = scmp.eq.s32.totalorder %s14, 0
      %p156 = por %p154, %p155
      %p157 = scmp.ne.s32.totalorder %s146, %s149
      %p158 = scmp.eq.s32.totalorder %s19, 1
      %p159 = por %p157, %p158
      %p160 = scmp.ne.s32.totalorder %s149, %s150
      %p161 = scmp.eq.s32.totalorder %s19, 0
      %p162 = por %p160, %p161
      %p163 = scmp.ne.s32.totalorder %s149, %s150
      %p164 = scmp.eq.s32.totalorder %s20, 1
      %p165 = por %p163, %p164
      %p167 = scmp.ne.s32.totalorder %s150, %s166
      %p168 = scmp.eq.s32.totalorder %s20, 0
      %p169 = por %p167, %p168
      %p170 = scmp.le.s32.totalorder 1, %s14
      %p171 = scmp.lt.s32.totalorder %s14, 3
      %p172 = pnand %p170, %p171
      %p173 = pneg %p172
      // Predicated region
      $region9: #{tpu_custom_call.1} parent=5 // pred_check
        _
      $region10: #{tpu_custom_call.1} parent=5 // pred_check_branch
        %175 = sbr.rel (%p172) target = $region12
      $region11: #{tpu_custom_call.1} parent=5 // pred_region
        %s176 = ssub.s32 %s14, 1
      $region12: #{tpu_custom_call.1} parent=5 // pred_fallthru
        _
      %p177 = scmp.lt.s32.totalorder %s14, 2
      // Predicated region
      $region13: #{tpu_custom_call.1} parent=5 // pred_check
        %p178 = pneg %p177
      $region14: #{tpu_custom_call.1} parent=5 // pred_check_branch
        %180 = sbr.rel (%p178) target = $region16
      $region15: #{tpu_custom_call.1} parent=5 // pred_region
        // Predicated region
        $region17: #{tpu_custom_call.1} parent=15 // pred_check
          %p181 = pneg %p48
        $region18: #{tpu_custom_call.1} parent=15 // pred_check_branch
          %183 = sbr.rel (%p181) target = $region20
        $region19: #{tpu_custom_call.1} parent=15 // pred_region
          %s184 = smul.u32 16, %s22
          %p185 = scmp.lt.s32.totalorder %s21, 1
          %s186 = scalar_select %p185, %s21, 1
          %p187 = scmp.lt.s32.totalorder %s184, 15
          %s188 = scalar_select %p187, %s184, 15
          %s189 = smul.addr %s186, 16
          %s190 = sadd.s32 %s188, %s189
          %s191 = smul.addr %s190, 8
          %s192 = scalar_lea.vmem %s0, %s191
          %s193 = smul.u32 16, %s22
        $region20: #{tpu_custom_call.1} parent=15 // pred_fallthru
          _
        // Predicated region
        $region21: #{tpu_custom_call.1} parent=15 // pred_check
          %p194 = pneg %p74
        $region22: #{tpu_custom_call.1} parent=15 // pred_check_branch
          %196 = sbr.rel (%p194) target = $region24
        $region23: #{tpu_custom_call.1} parent=15 // pred_region
          %p197 = scmp.lt.s32.totalorder %s21, 1
          %s198 = scalar_select %p197, %s21, 1
          %s199 = smul.addr %s198, 16
          %s200 = smul.addr %s199, 8
          %s201 = scalar_lea.vmem %s1, %s200
        $region24: #{tpu_custom_call.1} parent=15 // pred_fallthru
          _
        // Predicated region
        $region25: #{tpu_custom_call.1} parent=15 // pred_check
          %p202 = pneg %p100
        $region26: #{tpu_custom_call.1} parent=15 // pred_check_branch
          %204 = sbr.rel (%p202) target = $region28
        $region27: #{tpu_custom_call.1} parent=15 // pred_region
          %p205 = scmp.lt.s32.totalorder %s21, 1
          %s206 = scalar_select %p205, %s21, 1
          %s207 = smul.addr %s206, 16
          %s208 = smul.addr %s207, 8
          %s209 = scalar_lea.vmem %s2, %s208
        $region28: #{tpu_custom_call.1} parent=15 // pred_fallthru
          _
      $region16: #{tpu_custom_call.1} parent=5 // pred_fallthru
        _
      %p210 = scmp.le.s32.totalorder 1, %s14
      %p211 = scmp.lt.s32.totalorder %s14, 3
      %p212 = pnand %p210, %p211
      %p213 = pneg %p212
      // Predicated region
      $region29: #{tpu_custom_call.1} parent=5 // pred_check
        _
      $region30: #{tpu_custom_call.1} parent=5 // pred_check_branch
        %215 = sbr.rel (%p212) target = $region32
      $region31: #{tpu_custom_call.1} parent=5 // pred_region
        %s216 = ssub.s32 %s14, 1
        %s217 = smul.u32 16, %s24
        %p218 = scmp.lt.s32.totalorder %s23, 1
        %s219 = scalar_select %p218, %s23, 1
        %p220 = scmp.lt.s32.totalorder %s217, 15
        %s221 = scalar_select %p220, %s217, 15
        %s222 = smul.addr %s219, 16
        %s223 = sadd.s32 %s221, %s222
        %s224 = smul.addr %s223, 8
        %s225 = scalar_lea.vmem %s0, %s224
        %p226 = pneg %p54
        %p227 = pneg %p51
        %p228 = scmp.lt.s32.totalorder %s23, 1
        %s229 = scalar_select %p228, %s23, 1
        %s230 = smul.addr %s229, 16
        %s231 = smul.addr %s230, 8
        %s232 = scalar_lea.vmem %s1, %s231
        %p233 = pneg %p80
        %p234 = pneg %p77
        %p235 = scmp.lt.s32.totalorder %s23, 1
        %s236 = scalar_select %p235, %s23, 1
        %s237 = smul.addr %s236, 16
        %s238 = smul.addr %s237, 8
        %s239 = scalar_lea.vmem %s2, %s238
        %p240 = pneg %p106
        %p241 = pneg %p103
        %p242 = pneg %p134
        %p243 = pneg %p131
        %s244 = smul.u32 16, %s24
        %p245 = scmp.lt.s32.totalorder %s23, 1
        %s246 = scalar_select %p245, %s23, 1
        %p247 = scmp.lt.s32.totalorder %s244, 15
        %s248 = scalar_select %p247, %s244, 15
        %s249 = smul.addr %s246, 16
        %s250 = sadd.s32 %s248, %s249
        %s251 = smul.addr %s250, 8
        %s252 = scalar_lea.vmem %s3, %s251
        %p253 = pneg %p162
        %p254 = pneg %p159
        %s255 = sand.u32 %s149, 1
        %s256 = scalar_lea.sflag [#allocation3], %s255
        %s257 = sand.u32 %s149, 1
        %s258 = smul.addr %s257, 128
        %s259 = scalar_lea.vmem [#allocation2], %s258
        %s260 = smul.u32 16, %s24
        %p261 = scmp.lt.s32.totalorder %s23, 1
        %s262 = scalar_select %p261, %s23, 1
        %p263 = scmp.lt.s32.totalorder %s260, 15
        %s264 = scalar_select %p263, %s260, 15
        %s265 = smul.addr %s262, 16
        %s266 = sadd.s32 %s264, %s265
        %s267 = smul.addr %s266, 8
        %s268 = scalar_lea.vmem %s0, %s267
        %s269 = smul.u32 16, %s24
        %p270 = scmp.lt.s32.totalorder %s23, 1
        %s271 = scalar_select %p270, %s23, 1
        %s272 = smul.addr %s271, 16
        %s273 = smul.addr %s272, 8
        %s274 = scalar_lea.vmem %s1, %s273
        %p275 = scmp.lt.s32.totalorder %s23, 1
        %s276 = scalar_select %p275, %s23, 1
        %s277 = smul.addr %s276, 16
        %s278 = smul.addr %s277, 8
        %s279 = scalar_lea.vmem %s2, %s278
        %s280 = smul.u32 16, %s24
        %p281 = scmp.lt.s32.totalorder %s23, 1
        %s282 = scalar_select %p281, %s23, 1
        %p283 = scmp.lt.s32.totalorder %s280, 15
        %s284 = scalar_select %p283, %s280, 15
        %s285 = smul.addr %s282, 16
        %s286 = sadd.s32 %s284, %s285
        %s287 = smul.addr %s286, 8
        %s288 = scalar_lea.vmem %s3, %s287
        %s289 = smul.u32 16, %s24
        %s290 = smul.u32 16, %s24
        %v291 = vld [vmem:[%s268] sm:$0xff]
        %v292 = vld [vmem:[%s268 + $0x8] sm:$0xff]
        %v293 = vld [vmem:[%s268 + $0x10] sm:$0xff]
        %v294 = vld [vmem:[%s268 + $0x18] sm:$0xff]
        %v295 = vld [vmem:[%s268 + $0x20] sm:$0xff]
        %v296 = vld [vmem:[%s268 + $0x28] sm:$0xff]
        %v297 = vld [vmem:[%s268 + $0x30] sm:$0xff]
        %v298 = vld [vmem:[%s268 + $0x38] sm:$0xff]
        %v299 = vld [vmem:[%s268 + $0x40] sm:$0xff]
        %v300 = vld [vmem:[%s268 + $0x48] sm:$0xff]
        %v301 = vld [vmem:[%s268 + $0x50] sm:$0xff]
        %v302 = vld [vmem:[%s268 + $0x58] sm:$0xff]
        %v303 = vld [vmem:[%s268 + $0x60] sm:$0xff]
        %v304 = vld [vmem:[%s268 + $0x68] sm:$0xff]
        %v305 = vld [vmem:[%s268 + $0x70] sm:$0xff]
        %v306 = vld [vmem:[%s268 + $0x78] sm:$0xff]
        %v307 = vmul.f32 %v291, 0.125
        %v308 = vmul.f32 %v292, 0.125
        %v309 = vmul.f32 %v293, 0.125
        %v310 = vmul.f32 %v294, 0.125
        %v311 = vmul.f32 %v295, 0.125
        %v312 = vmul.f32 %v296, 0.125
        %v313 = vmul.f32 %v297, 0.125
        %v314 = vmul.f32 %v298, 0.125
        %v315 = vmul.f32 %v299, 0.125
        %v316 = vmul.f32 %v300, 0.125
        %v317 = vmul.f32 %v301, 0.125
        %v318 = vmul.f32 %v302, 0.125
        %v319 = vmul.f32 %v303, 0.125
        %v320 = vmul.f32 %v304, 0.125
        %v321 = vmul.f32 %v305, 0.125
        %v322 = vmul.f32 %v306, 0.125
        %v323 = vld [vmem:[%s274] sm:$0xff]
        %v324 = vld [vmem:[%s274 + $0x8] sm:$0xff]
        %v325 = vld [vmem:[%s274 + $0x10] sm:$0xff]
        %v326 = vld [vmem:[%s274 + $0x18] sm:$0xff]
        %v327 = vld [vmem:[%s274 + $0x20] sm:$0xff]
        %v328 = vld [vmem:[%s274 + $0x28] sm:$0xff]
        %v329 = vld [vmem:[%s274 + $0x30] sm:$0xff]
        %v330 = vld [vmem:[%s274 + $0x38] sm:$0xff]
        %v331 = vld [vmem:[%s274 + $0x40] sm:$0xff]
        %v332 = vld [vmem:[%s274 + $0x48] sm:$0xff]
        %v333 = vld [vmem:[%s274 + $0x50] sm:$0xff]
        %v334 = vld [vmem:[%s274 + $0x58] sm:$0xff]
        %v335 = vld [vmem:[%s274 + $0x60] sm:$0xff]
        %v336 = vld [vmem:[%s274 + $0x68] sm:$0xff]
        %v337 = vld [vmem:[%s274 + $0x70] sm:$0xff]
        %v338 = vld [vmem:[%s274 + $0x78] sm:$0xff]
        %v339 = vld [vmem:[%s279] sm:$0xff]
        %v340 = vld [vmem:[%s279 + $0x8] sm:$0xff]
        %v341 = vld [vmem:[%s279 + $0x10] sm:$0xff]
        %v342 = vld [vmem:[%s279 + $0x18] sm:$0xff]
        %v343 = vld [vmem:[%s279 + $0x20] sm:$0xff]
        %v344 = vld [vmem:[%s279 + $0x28] sm:$0xff]
        %v345 = vld [vmem:[%s279 + $0x30] sm:$0xff]
        %v346 = vld [vmem:[%s279 + $0x38] sm:$0xff]
        %v347 = vld [vmem:[%s279 + $0x40] sm:$0xff]
        %v348 = vld [vmem:[%s279 + $0x48] sm:$0xff]
        %v349 = vld [vmem:[%s279 + $0x50] sm:$0xff]
        %v350 = vld [vmem:[%s279 + $0x58] sm:$0xff]
        %v351 = vld [vmem:[%s279 + $0x60] sm:$0xff]
        %v352 = vld [vmem:[%s279 + $0x68] sm:$0xff]
        %v353 = vld [vmem:[%s279 + $0x70] sm:$0xff]
        %v354 = vld [vmem:[%s279 + $0x78] sm:$0xff]
        %vm355 = vcmask 523264
        %v357 = vsel %vm355, %v307, 0
        %v360 = vsel %vm355, %v308, 0
        %v363 = vsel %vm355, %v309, 0
        %v366 = vsel %vm355, %v310, 0
        %v369 = vsel %vm355, %v311, 0
        %v372 = vsel %vm355, %v312, 0
        %v375 = vsel %vm355, %v313, 0
        %v378 = vsel %vm355, %v314, 0
        %v381 = vsel %vm355, %v315, 0
        %v384 = vsel %vm355, %v316, 0
        %v387 = vsel %vm355, %v317, 0
        %v390 = vsel %vm355, %v318, 0
        %v393 = vsel %vm355, %v319, 0
        %v396 = vsel %vm355, %v320, 0
        %v399 = vsel %vm355, %v321, 0
        %v402 = vsel %vm355, %v322, 0
        %v405 = vsel %vm355, %v323, 0
        %v408 = vsel %vm355, %v324, 0
        %v411 = vsel %vm355, %v325, 0
        %v414 = vsel %vm355, %v326, 0
        %v417 = vsel %vm355, %v327, 0
        %v420 = vsel %vm355, %v328, 0
        %v423 = vsel %vm355, %v329, 0
        %v426 = vsel %vm355, %v330, 0
        %v429 = vsel %vm355, %v331, 0
        %v432 = vsel %vm355, %v332, 0
        %v435 = vsel %vm355, %v333, 0
        %v438 = vsel %vm355, %v334, 0
        %v441 = vsel %vm355, %v335, 0
        %v444 = vsel %vm355, %v336, 0
        %v447 = vsel %vm355, %v337, 0
        %v450 = vsel %vm355, %v338, 0
        %452 = vmatprep.subr.mxu0 0.0
        %453 = vmatpush1.xpose.msra.mxu0 %v405
        %454 = vmatprep.subr.mxu0 0.0
        %455 = vmatpush1.xpose.msra.mxu0 %v408
        %456 = vmatprep.subr.mxu0 0.0
        %457 = vmatpush1.xpose.msra.mxu0 %v411
        %458 = vmatprep.subr.mxu0 0.0
        %459 = vmatpush1.xpose.msra.mxu0 %v414
        %460 = vmatprep.subr.mxu0 0.0
        %461 = vmatpush1.xpose.msra.mxu0 %v417
        %462 = vmatprep.subr.mxu0 0.0
        %463 = vmatpush1.xpose.msra.mxu0 %v420
        %464 = vmatprep.subr.mxu0 0.0
        %465 = vmatpush1.xpose.msra.mxu0 %v423
        %466 = vmatprep.subr.mxu0 0.0
        %467 = vmatpush1.xpose.msra.mxu0 %v426
        %468 = vmatprep.subr.mxu0 0.0
        %469 = vmatpush1.xpose.msra.mxu0 %v429
        %470 = vmatprep.subr.mxu0 0.0
        %471 = vmatpush1.xpose.msra.mxu0 %v432
        %472 = vmatprep.subr.mxu0 0.0
        %473 = vmatpush1.xpose.msra.mxu0 %v435
        %474 = vmatprep.subr.mxu0 0.0
        %475 = vmatpush1.xpose.msra.mxu0 %v438
        %476 = vmatprep.subr.mxu0 0.0
        %477 = vmatpush1.xpose.msra.mxu0 %v441
        %478 = vmatprep.subr.mxu0 0.0
        %479 = vmatpush1.xpose.msra.mxu0 %v444
        %480 = vmatprep.subr.mxu0 0.0
        %481 = vmatpush1.xpose.msra.mxu0 %v447
        %482 = vmatprep.subr.mxu0 0.0
        %483 = vmatpush1.xpose.msra.mxu0 %v450
        %484 = vmatprep.subr.mxu0 0.0
        %485 = vmatpush1.xpose.msra.mxu0 0.0
        %486 = vmatprep.subr.mxu0 0.0
        %487 = vmatpush1.xpose.msra.mxu0 0.0
        %488 = vmatprep.subr.mxu0 0.0
        %489 = vmatpush1.xpose.msra.mxu0 0.0
        %490 = vmatprep.subr.mxu0 0.0
        %491 = vmatpush1.xpose.msra.mxu0 0.0
        %492 = vmatprep.subr.mxu0 0.0
        %493 = vmatpush1.xpose.msra.mxu0 0.0
        %494 = vmatprep.subr.mxu0 0.0
        %495 = vmatpush1.xpose.msra.mxu0 0.0
        %496 = vmatprep.subr.mxu0 0.0
        %497 = vmatpush1.xpose.msra.mxu0 0.0
        %498 = vmatprep.subr.mxu0 0.0
        %499 = vmatpush1.xpose.msra.mxu0 0.0
        %500 = vmatprep.subr.mxu0 0.0
        %501 = vmatpush1.xpose.msra.mxu0 0.0
        %502 = vmatprep.subr.mxu0 0.0
        %503 = vmatpush1.xpose.msra.mxu0 0.0
        %504 = vmatprep.subr.mxu0 0.0
        %505 = vmatpush1.xpose.msra.mxu0 0.0
        %506 = vmatprep.subr.mxu0 0.0
        %507 = vmatpush1.xpose.msra.mxu0 0.0
        %508 = vmatprep.subr.mxu0 0.0
        %509 = vmatpush1.xpose.msra.mxu0 0.0
        %510 = vmatprep.subr.mxu0 0.0
        %511 = vmatpush1.xpose.msra.mxu0 0.0
        %512 = vmatprep.subr.mxu0 0.0
        %513 = vmatpush1.xpose.msra.mxu0 0.0
        %514 = vmatprep.subr.mxu0 0.0
        %515 = vmatpush1.xpose.msra.mxu0 0.0
        %516 = vmatprep.mubr.f32.mxu0 0.0
        %517 = vmatmul.mubr.f32.gmra.mrb[0].mxu0 %v357
        %v518 = vpop.f32.mrb[0].mxu0
        %v519 = vadd.f32 0.0, %v518
        %v520 = vpop.f32.mrb[0].mxu0
        %521 = vmatprep.mubr.f32.mxu0 0.0
        %522 = vmatmul.mubr.f32.gmra.mrb[0].mxu0 %v360
        %v523 = vpop.f32.mrb[0].mxu0
        %v524 = vadd.f32 0.0, %v523
        %v525 = vpop.f32.mrb[0].mxu0
        %526 = vmatprep.mubr.f32.mxu0 0.0
        %527 = vmatmul.mubr.f32.gmra.mrb[0].mxu0 %v363
        %v528 = vpop.f32.mrb[0].mxu0
        %v529 = vadd.f32 0.0, %v528
        %v530 = vpop.f32.mrb[0].mxu0
        %531 = vmatprep.mubr.f32.mxu0 0.0
        %532 = vmatmul.mubr.f32.gmra.mrb[0].mxu0 %v366
        %v533 = vpop.f32.mrb[0].mxu0
        %v534 = vadd.f32 0.0, %v533
        %v535 = vpop.f32.mrb[0].mxu0
        %536 = vmatprep.mubr.f32.mxu0 0.0
        %537 = vmatmul.mubr.f32.gmra.mrb[0].mxu0 %v369
        %v538 = vpop.f32.mrb[0].mxu0
        %v539 = vadd.f32 0.0, %v538
        %v540 = vpop.f32.mrb[0].mxu0
        %541 = vmatprep.mubr.f32.mxu0 0.0
        %542 = vmatmul.mubr.f32.gmra.mrb[0].mxu0 %v372
        %v543 = vpop.f32.mrb[0].mxu0
        %v544 = vadd.f32 0.0, %v543
        %v545 = vpop.f32.mrb[0].mxu0
        %546 = vmatprep.mubr.f32.mxu0 0.0
        %547 = vmatmul.mubr.f32.gmra.mrb[0].mxu0 %v375
        %v548 = vpop.f32.mrb[0].mxu0
        %v549 = vadd.f32 0.0, %v548
        %v550 = vpop.f32.mrb[0].mxu0
        %551 = vmatprep.mubr.f32.mxu0 0.0
        %552 = vmatmul.mubr.f32.gmra.mrb[0].mxu0 %v378
        %v553 = vpop.f32.mrb[0].mxu0
        %v554 = vadd.f32 0.0, %v553
        %v555 = vpop.f32.mrb[0].mxu0
        %556 = vmatprep.mubr.f32.mxu0 0.0
        %557 = vmatmul.mubr.f32.gmra.mrb[0].mxu0 %v381
        %v558 = vpop.f32.mrb[0].mxu0
        %v559 = vadd.f32 0.0, %v558
        %v560 = vpop.f32.mrb[0].mxu0
        %561 = vmatprep.mubr.f32.mxu0 0.0
        %562 = vmatmul.mubr.f32.gmra.mrb[0].mxu0 %v384
        %v563 = vpop.f32.mrb[0].mxu0
        %v564 = vadd.f32 0.0, %v563
        %v565 = vpop.f32.mrb[0].mxu0
        %566 = vmatprep.mubr.f32.mxu0 0.0
        %567 = vmatmul.mubr.f32.gmra.mrb[0].mxu0 %v387
        %v568 = vpop.f32.mrb[0].mxu0
        %v569 = vadd.f32 0.0, %v568
        %v570 = vpop.f32.mrb[0].mxu0
        %571 = vmatprep.mubr.f32.mxu0 0.0
        %572 = vmatmul.mubr.f32.gmra.mrb[0].mxu0 %v390
        %v573 = vpop.f32.mrb[0].mxu0
        %v574 = vadd.f32 0.0, %v573
        %v575 = vpop.f32.mrb[0].mxu0
        %576 = vmatprep.mubr.f32.mxu0 0.0
        %577 = vmatmul.mubr.f32.gmra.mrb[0].mxu0 %v393
        %v578 = vpop.f32.mrb[0].mxu0
        %v579 = vadd.f32 0.0, %v578
        %v580 = vpop.f32.mrb[0].mxu0
        %581 = vmatprep.mubr.f32.mxu0 0.0
        %582 = vmatmul.mubr.f32.gmra.mrb[0].mxu0 %v396
        %v583 = vpop.f32.mrb[0].mxu0
        %v584 = vadd.f32 0.0, %v583
        %v585 = vpop.f32.mrb[0].mxu0
        %586 = vmatprep.mubr.f32.mxu0 0.0
        %587 = vmatmul.mubr.f32.gmra.mrb[0].mxu0 %v399
        %v588 = vpop.f32.mrb[0].mxu0
        %v589 = vadd.f32 0.0, %v588
        %v590 = vpop.f32.mrb[0].mxu0
        %591 = vmatprep.mubr.f32.mxu0 0.0
        %592 = vmatmul.mubr.f32.gmra.mrb[0].mxu0 %v402
        %v593 = vpop.f32.mrb[0].mxu0
        %v594 = vadd.f32 0.0, %v593
        %v595 = vpop.f32.mrb[0].mxu0
        %596 = vdwg.mxu0
        %597 = vmax.xlane.f32.xlu0 %v519
        %v598 = vpop.xlane.xlu0 %597
        %599 = vmax.xlane.f32.xlu0 %v524
        %v600 = vpop.xlane.xlu0 %599
        %601 = vmax.xlane.f32.xlu0 %v529
        %v602 = vpop.xlane.xlu0 %601
        %603 = vmax.xlane.f32.xlu0 %v534
        %v604 = vpop.xlane.xlu0 %603
        %605 = vmax.xlane.f32.xlu0 %v539
        %v606 = vpop.xlane.xlu0 %605
        %607 = vmax.xlane.f32.xlu0 %v544
        %v608 = vpop.xlane.xlu0 %607
        %609 = vmax.xlane.f32.xlu0 %v549
        %v610 = vpop.xlane.xlu0 %609
        %611 = vmax.xlane.f32.xlu0 %v554
        %v612 = vpop.xlane.xlu0 %611
        %613 = vmax.xlane.f32.xlu0 %v559
        %v614 = vpop.xlane.xlu0 %613
        %615 = vmax.xlane.f32.xlu0 %v564
        %v616 = vpop.xlane.xlu0 %615
        %617 = vmax.xlane.f32.xlu0 %v569
        %v618 = vpop.xlane.xlu0 %617
        %619 = vmax.xlane.f32.xlu0 %v574
        %v620 = vpop.xlane.xlu0 %619
        %621 = vmax.xlane.f32.xlu0 %v579
        %v622 = vpop.xlane.xlu0 %621
        %623 = vmax.xlane.f32.xlu0 %v584
        %v624 = vpop.xlane.xlu0 %623
        %625 = vmax.xlane.f32.xlu0 %v589
        %v626 = vpop.xlane.xlu0 %625
        %627 = vmax.xlane.f32.xlu0 %v594
        %v628 = vpop.xlane.xlu0 %627
        %v629 = vsub.f32 %v519, %v598
        %v630 = vsub.f32 %v524, %v600
        %v631 = vsub.f32 %v529, %v602
        %v632 = vsub.f32 %v534, %v604
        %v633 = vsub.f32 %v539, %v606
        %v634 = vsub.f32 %v544, %v608
        %v635 = vsub.f32 %v549, %v610
        %v636 = vsub.f32 %v554, %v612
        %v637 = vsub.f32 %v559, %v614
        %v638 = vsub.f32 %v564, %v616
        %v639 = vsub.f32 %v569, %v618
        %v640 = vsub.f32 %v574, %v620
        %v641 = vsub.f32 %v579, %v622
        %v642 = vsub.f32 %v584, %v624
        %v643 = vsub.f32 %v589, %v626
        %v644 = vsub.f32 %v594, %v628
        %v645 = vmul.f32 %v629, 1.442695
        %v646 = vpow.pop %v645
        %v647 = vmul.f32 %v630, 1.442695
        %v648 = vpow.pop %v647
        %v649 = vmul.f32 %v631, 1.442695
        %v650 = vpow.pop %v649
        %v651 = vmul.f32 %v632, 1.442695
        %v652 = vpow.pop %v651
        %v653 = vmul.f32 %v633, 1.442695
        %v654 = vpow.pop %v653
        %v655 = vmul.f32 %v634, 1.442695
        %v656 = vpow.pop %v655
        %v657 = vmul.f32 %v635, 1.442695
        %v658 = vpow.pop %v657
        %v659 = vmul.f32 %v636, 1.442695
        %v660 = vpow.pop %v659
        %v661 = vmul.f32 %v637, 1.442695
        %v662 = vpow.pop %v661
        %v663 = vmul.f32 %v638, 1.442695
        %v664 = vpow.pop %v663
        %v665 = vmul.f32 %v639, 1.442695
        %v666 = vpow.pop %v665
        %v667 = vmul.f32 %v640, 1.442695
        %v668 = vpow.pop %v667
        %v669 = vmul.f32 %v641, 1.442695
        %v670 = vpow.pop %v669
        %v671 = vmul.f32 %v642, 1.442695
        %v672 = vpow.pop %v671
        %v673 = vmul.f32 %v643, 1.442695
        %v674 = vpow.pop %v673
        %v675 = vmul.f32 %v644, 1.442695
        %v676 = vpow.pop %v675
        %677 = vadd.xlane.f32.xlu0 %v646
        %v678 = vpop.xlane.xlu0 %677
        %679 = vadd.xlane.f32.xlu0 %v648
        %v680 = vpop.xlane.xlu0 %679
        %681 = vadd.xlane.f32.xlu0 %v650
        %v682 = vpop.xlane.xlu0 %681
        %683 = vadd.xlane.f32.xlu0 %v652
        %v684 = vpop.xlane.xlu0 %683
        %685 = vadd.xlane.f32.xlu0 %v654
        %v686 = vpop.xlane.xlu0 %685
        %687 = vadd.xlane.f32.xlu0 %v656
        %v688 = vpop.xlane.xlu0 %687
        %689 = vadd.xlane.f32.xlu0 %v658
        %v690 = vpop.xlane.xlu0 %689
        %691 = vadd.xlane.f32.xlu0 %v660
        %v692 = vpop.xlane.xlu0 %691
        %693 = vadd.xlane.f32.xlu0 %v662
        %v694 = vpop.xlane.xlu0 %693
        %695 = vadd.xlane.f32.xlu0 %v664
        %v696 = vpop.xlane.xlu0 %695
        %697 = vadd.xlane.f32.xlu0 %v666
        %v698 = vpop.xlane.xlu0 %697
        %699 = vadd.xlane.f32.xlu0 %v668
        %v700 = vpop.xlane.xlu0 %699
        %701 = vadd.xlane.f32.xlu0 %v670
        %v702 = vpop.xlane.xlu0 %701
        %703 = vadd.xlane.f32.xlu0 %v672
        %v704 = vpop.xlane.xlu0 %703
        %705 = vadd.xlane.f32.xlu0 %v674
        %v706 = vpop.xlane.xlu0 %705
        %707 = vadd.xlane.f32.xlu0 %v676
        %v708 = vpop.xlane.xlu0 %707
        %v709 = vrcp.pop %v678
        %v710 = vmul.f32 1.0, %v709
        %v711 = vrcp.pop %v680
        %v712 = vmul.f32 1.0, %v711
        %v713 = vrcp.pop %v682
        %v714 = vmul.f32 1.0, %v713
        %v715 = vrcp.pop %v684
        %v716 = vmul.f32 1.0, %v715
        %v717 = vrcp.pop %v686
        %v718 = vmul.f32 1.0, %v717
        %v719 = vrcp.pop %v688
        %v720 = vmul.f32 1.0, %v719
        %v721 = vrcp.pop %v690
        %v722 = vmul.f32 1.0, %v721
        %v723 = vrcp.pop %v692
        %v724 = vmul.f32 1.0, %v723
        %v725 = vrcp.pop %v694
        %v726 = vmul.f32 1.0, %v725
        %v727 = vrcp.pop %v696
        %v728 = vmul.f32 1.0, %v727
        %v729 = vrcp.pop %v698
        %v730 = vmul.f32 1.0, %v729
        %v731 = vrcp.pop %v700
        %v732 = vmul.f32 1.0, %v731
        %v733 = vrcp.pop %v702
        %v734 = vmul.f32 1.0, %v733
        %v735 = vrcp.pop %v704
        %v736 = vmul.f32 1.0, %v735
        %v737 = vrcp.pop %v706
        %v738 = vmul.f32 1.0, %v737
        %v739 = vrcp.pop %v708
        %v740 = vmul.f32 1.0, %v739
        %v741 = vmul.f32 %v646, %v710
        %v742 = vmul.f32 %v648, %v712
        %v743 = vmul.f32 %v650, %v714
        %v744 = vmul.f32 %v652, %v716
        %v745 = vmul.f32 %v654, %v718
        %v746 = vmul.f32 %v656, %v720
        %v747 = vmul.f32 %v658, %v722
        %v748 = vmul.f32 %v660, %v724
        %v749 = vmul.f32 %v662, %v726
        %v750 = vmul.f32 %v664, %v728
        %v751 = vmul.f32 %v666, %v730
        %v752 = vmul.f32 %v668, %v732
        %v753 = vmul.f32 %v670, %v734
        %v754 = vmul.f32 %v672, %v736
        %v755 = vmul.f32 %v674, %v738
        %v756 = vmul.f32 %v676, %v740
        %757 = vst [vmem:[%s259] sm:$0xff] %v741
        %758 = vst [vmem:[%s259 + $0x8] sm:$0xff] %v742
        %759 = vst [vmem:[%s259 + $0x10] sm:$0xff] %v743
        %760 = vst [vmem:[%s259 + $0x18] sm:$0xff] %v744
        %761 = vst [vmem:[%s259 + $0x20] sm:$0xff] %v745
        %762 = vst [vmem:[%s259 + $0x28] sm:$0xff] %v746
        %763 = vst [vmem:[%s259 + $0x30] sm:$0xff] %v747
        %764 = vst [vmem:[%s259 + $0x38] sm:$0xff] %v748
        %765 = vst [vmem:[%s259 + $0x40] sm:$0xff] %v749
        %766 = vst [vmem:[%s259 + $0x48] sm:$0xff] %v750
        %767 = vst [vmem:[%s259 + $0x50] sm:$0xff] %v751
        %768 = vst [vmem:[%s259 + $0x58] sm:$0xff] %v752
        %769 = vst [vmem:[%s259 + $0x60] sm:$0xff] %v753
        %770 = vst [vmem:[%s259 + $0x68] sm:$0xff] %v754
        %771 = vst [vmem:[%s259 + $0x70] sm:$0xff] %v755
        %772 = vst [vmem:[%s259 + $0x78] sm:$0xff] %v756
        %773 = vmatprep.subr.mxu0 0.0
        %774 = vmatpush1.msra.mxu0 %v339
        %775 = vmatprep.subr.mxu0 0.0
        %776 = vmatpush1.msra.mxu0 %v340
        %777 = vmatprep.subr.mxu0 0.0
        %778 = vmatpush1.msra.mxu0 %v341
        %779 = vmatprep.subr.mxu0 0.0
        %780 = vmatpush1.msra.mxu0 %v342
        %781 = vmatprep.subr.mxu0 0.0
        %782 = vmatpush1.msra.mxu0 %v343
        %783 = vmatprep.subr.mxu0 0.0
        %784 = vmatpush1.msra.mxu0 %v344
        %785 = vmatprep.subr.mxu0 0.0
        %786 = vmatpush1.msra.mxu0 %v345
        %787 = vmatprep.subr.mxu0 0.0
        %788 = vmatpush1.msra.mxu0 %v346
        %789 = vmatprep.subr.mxu0 0.0
        %790 = vmatpush1.msra.mxu0 %v347
        %791 = vmatprep.subr.mxu0 0.0
        %792 = vmatpush1.msra.mxu0 %v348
        %793 = vmatprep.subr.mxu0 0.0
        %794 = vmatpush1.msra.mxu0 %v349
        %795 = vmatprep.subr.mxu0 0.0
        %796 = vmatpush1.msra.mxu0 %v350
        %797 = vmatprep.subr.mxu0 0.0
        %798 = vmatpush1.msra.mxu0 %v351
        %799 = vmatprep.subr.mxu0 0.0
        %800 = vmatpush1.msra.mxu0 %v352
        %801 = vmatprep.subr.mxu0 0.0
        %802 = vmatpush1.msra.mxu0 %v353
        %803 = vmatprep.subr.mxu0 0.0
        %804 = vmatpush1.msra.mxu0 %v354
        %805 = vmatprep.subr.mxu0 0.0
        %806 = vmatpush1.msra.mxu0 0.0
        %807 = vmatprep.subr.mxu0 0.0
        %808 = vmatpush1.msra.mxu0 0.0
        %809 = vmatprep.subr.mxu0 0.0
        %810 = vmatpush1.msra.mxu0 0.0
        %811 = vmatprep.subr.mxu0 0.0
        %812 = vmatpush1.msra.mxu0 0.0
        %813 = vmatprep.subr.mxu0 0.0
        %814 = vmatpush1.msra.mxu0 0.0
        %815 = vmatprep.subr.mxu0 0.0
        %816 = vmatpush1.msra.mxu0 0.0
        %817 = vmatprep.subr.mxu0 0.0
        %818 = vmatpush1.msra.mxu0 0.0
        %819 = vmatprep.subr.mxu0 0.0
        %820 = vmatpush1.msra.mxu0 0.0
        %821 = vmatprep.subr.mxu0 0.0
        %822 = vmatpush1.msra.mxu0 0.0
        %823 = vmatprep.subr.mxu0 0.0
        %824 = vmatpush1.msra.mxu0 0.0
        %825 = vmatprep.subr.mxu0 0.0
        %826 = vmatpush1.msra.mxu0 0.0
        %827 = vmatprep.subr.mxu0 0.0
        %828 = vmatpush1.msra.mxu0 0.0
        %829 = vmatprep.subr.mxu0 0.0
        %830 = vmatpush1.msra.mxu0 0.0
        %831 = vmatprep.subr.mxu0 0.0
        %832 = vmatpush1.msra.mxu0 0.0
        %833 = vmatprep.subr.mxu0 0.0
        %834 = vmatpush1.msra.mxu0 0.0
        %835 = vmatprep.subr.mxu0 0.0
        %836 = vmatpush1.msra.mxu0 0.0
        %837 = vmatprep.mubr.f32.mxu0 0.0
        %838 = vmatmul.mubr.f32.gmra.mrb[0].mxu0 %v741
        %v839 = vpop.f32.mrb[0].mxu0
        %v840 = vadd.f32 0.0, %v839
        %v841 = vpop.f32.mrb[0].mxu0
        %842 = vmatprep.mubr.f32.mxu0 0.0
        %843 = vmatmul.mubr.f32.gmra.mrb[0].mxu0 %v742
        %v844 = vpop.f32.mrb[0].mxu0
        %v845 = vadd.f32 0.0, %v844
        %v846 = vpop.f32.mrb[0].mxu0
        %847 = vmatprep.mubr.f32.mxu0 0.0
        %848 = vmatmul.mubr.f32.gmra.mrb[0].mxu0 %v743
        %v849 = vpop.f32.mrb[0].mxu0
        %v850 = vadd.f32 0.0, %v849
        %v851 = vpop.f32.mrb[0].mxu0
        %852 = vmatprep.mubr.f32.mxu0 0.0
        %853 = vmatmul.mubr.f32.gmra.mrb[0].mxu0 %v744
        %v854 = vpop.f32.mrb[0].mxu0
        %v855 = vadd.f32 0.0, %v854
        %v856 = vpop.f32.mrb[0].mxu0
        %857 = vmatprep.mubr.f32.mxu0 0.0
        %858 = vmatmul.mubr.f32.gmra.mrb[0].mxu0 %v745
        %v859 = vpop.f32.mrb[0].mxu0
        %v860 = vadd.f32 0.0, %v859
        %v861 = vpop.f32.mrb[0].mxu0
        %862 = vmatprep.mubr.f32.mxu0 0.0
        %863 = vmatmul.mubr.f32.gmra.mrb[0].mxu0 %v746
        %v864 = vpop.f32.mrb[0].mxu0
        %v865 = vadd.f32 0.0, %v864
        %v866 = vpop.f32.mrb[0].mxu0
        %867 = vmatprep.mubr.f32.mxu0 0.0
        %868 = vmatmul.mubr.f32.gmra.mrb[0].mxu0 %v747
        %v869 = vpop.f32.mrb[0].mxu0
        %v870 = vadd.f32 0.0, %v869
        %v871 = vpop.f32.mrb[0].mxu0
        %872 = vmatprep.mubr.f32.mxu0 0.0
        %873 = vmatmul.mubr.f32.gmra.mrb[0].mxu0 %v748
        %v874 = vpop.f32.mrb[0].mxu0
        %v875 = vadd.f32 0.0, %v874
        %v876 = vpop.f32.mrb[0].mxu0
        %877 = vmatprep.mubr.f32.mxu0 0.0
        %878 = vmatmul.mubr.f32.gmra.mrb[0].mxu0 %v749
        %v879 = vpop.f32.mrb[0].mxu0
        %v880 = vadd.f32 0.0, %v879
        %v881 = vpop.f32.mrb[0].mxu0
        %882 = vmatprep.mubr.f32.mxu0 0.0
        %883 = vmatmul.mubr.f32.gmra.mrb[0].mxu0 %v750
        %v884 = vpop.f32.mrb[0].mxu0
        %v885 = vadd.f32 0.0, %v884
        %v886 = vpop.f32.mrb[0].mxu0
        %887 = vmatprep.mubr.f32.mxu0 0.0
        %888 = vmatmul.mubr.f32.gmra.mrb[0].mxu0 %v751
        %v889 = vpop.f32.mrb[0].mxu0
        %v890 = vadd.f32 0.0, %v889
        %v891 = vpop.f32.mrb[0].mxu0
        %892 = vmatprep.mubr.f32.mxu0 0.0
        %893 = vmatmul.mubr.f32.gmra.mrb[0].mxu0 %v752
        %v894 = vpop.f32.mrb[0].mxu0
        %v895 = vadd.f32 0.0, %v894
        %v896 = vpop.f32.mrb[0].mxu0
        %897 = vmatprep.mubr.f32.mxu0 0.0
        %898 = vmatmul.mubr.f32.gmra.mrb[0].mxu0 %v753
        %v899 = vpop.f32.mrb[0].mxu0
        %v900 = vadd.f32 0.0, %v899
        %v901 = vpop.f32.mrb[0].mxu0
        %902 = vmatprep.mubr.f32.mxu0 0.0
        %903 = vmatmul.mubr.f32.gmra.mrb[0].mxu0 %v754
        %v904 = vpop.f32.mrb[0].mxu0
        %v905 = vadd.f32 0.0, %v904
        %v906 = vpop.f32.mrb[0].mxu0
        %907 = vmatprep.mubr.f32.mxu0 0.0
        %908 = vmatmul.mubr.f32.gmra.mrb[0].mxu0 %v755
        %v909 = vpop.f32.mrb[0].mxu0
        %v910 = vadd.f32 0.0, %v909
        %v911 = vpop.f32.mrb[0].mxu0
        %912 = vmatprep.mubr.f32.mxu0 0.0
        %913 = vmatmul.mubr.f32.gmra.mrb[0].mxu0 %v756
        %v914 = vpop.f32.mrb[0].mxu0
        %v915 = vadd.f32 0.0, %v914
        %v916 = vpop.f32.mrb[0].mxu0
        %917 = vdwg.mxu0
        %918 = vst.msk [vmem:[%s288] sm:$0xff] %vm355, %v840
        %919 = vst.msk [vmem:[%s288 + $0x8] sm:$0xff] %vm355, %v845
        %920 = vst.msk [vmem:[%s288 + $0x10] sm:$0xff] %vm355, %v850
        %921 = vst.msk [vmem:[%s288 + $0x18] sm:$0xff] %vm355, %v855
        %922 = vst.msk [vmem:[%s288 + $0x20] sm:$0xff] %vm355, %v860
        %923 = vst.msk [vmem:[%s288 + $0x28] sm:$0xff] %vm355, %v865
        %924 = vst.msk [vmem:[%s288 + $0x30] sm:$0xff] %vm355, %v870
        %925 = vst.msk [vmem:[%s288 + $0x38] sm:$0xff] %vm355, %v875
        %926 = vst.msk [vmem:[%s288 + $0x40] sm:$0xff] %vm355, %v880
        %927 = vst.msk [vmem:[%s288 + $0x48] sm:$0xff] %vm355, %v885
        %928 = vst.msk [vmem:[%s288 + $0x50] sm:$0xff] %vm355, %v890
        %929 = vst.msk [vmem:[%s288 + $0x58] sm:$0xff] %vm355, %v895
        %930 = vst.msk [vmem:[%s288 + $0x60] sm:$0xff] %vm355, %v900
        %931 = vst.msk [vmem:[%s288 + $0x68] sm:$0xff] %vm355, %v905
        %932 = vst.msk [vmem:[%s288 + $0x70] sm:$0xff] %vm355, %v910
        %933 = vst.msk [vmem:[%s288 + $0x78] sm:$0xff] %vm355, %v915
        %s934 = smul.u32 16, %s24
        %p935 = scmp.lt.s32.totalorder %s23, 1
        %s936 = scalar_select %p935, %s23, 1
        %p937 = scmp.lt.s32.totalorder %s934, 15
        %s938 = scalar_select %p937, %s934, 15
        %s939 = smul.addr %s936, 16
        %s940 = sadd.s32 %s938, %s939
        %s941 = smul.addr %s940, 8
        %s942 = scalar_lea.vmem %s3, %s941
        %s943 = sand.u32 %s149, 1
        %s944 = scalar_lea.sflag [#allocation3], %s943
        %s945 = sand.u32 %s149, 1
        %s946 = smul.addr %s945, 128
        %s947 = scalar_lea.vmem [#allocation2], %s946
        // Predicated region
        $region33: #{tpu_custom_call.1} parent=31 // pred_check
          %p948 = pneg %p131
        $region34: #{tpu_custom_call.1} parent=31 // pred_check_branch
          %950 = sbr.rel (%p948) target = $region36
        $region35: #{tpu_custom_call.1} parent=31 // pred_region
          %s951 = smul.u32 16, %s24
        $region36: #{tpu_custom_call.1} parent=31 // pred_fallthru
          _
        // Predicated region
        $region37: #{tpu_custom_call.1} parent=31 // pred_check
          %p952 = pneg %p159
        $region38: #{tpu_custom_call.1} parent=31 // pred_check_branch
          %954 = sbr.rel (%p952) target = $region40
        $region39: #{tpu_custom_call.1} parent=31 // pred_region
          %s955 = smul.u32 16, %s24
          %s957 = ssub.s32 2048, 2048
          %958 = vsyncadd %s944, %s957
          %s959 = smul.addr %s23, 16
          %s960 = sadd.s32 %s955, %s959
          %s961 = smul.addr %s960, 128
          %s962 = scalar_lea.hbm %s4, %s961
          %s963 = sshll.u32 %s947, 4
          %s964 = int_to_ptr.vmem [resolvable:$true] %s963
          %969 = dma.vmem_to_hbm [thread:$0]  %s964, 2048, %s962, %s944, 128, 128, 8
        $region40: #{tpu_custom_call.1} parent=31 // pred_fallthru
          _
      $region32: #{tpu_custom_call.1} parent=5 // pred_fallthru
        _
      %p970 = scmp.le.s32.totalorder 2, %s14
      // Predicated region
      $region41: #{tpu_custom_call.1} parent=5 // pred_check
        %p971 = pneg %p970
      $region42: #{tpu_custom_call.1} parent=5 // pred_check_branch
        %973 = sbr.rel (%p971) target = $region44
      $region43: #{tpu_custom_call.1} parent=5 // pred_region
        %s974 = ssub.s32 %s14, 2
        // Predicated region
        $region45: #{tpu_custom_call.1} parent=43 // pred_check
          %p975 = pneg %p137
        $region46: #{tpu_custom_call.1} parent=43 // pred_check_branch
          %977 = sbr.rel (%p975) target = $region48
        $region47: #{tpu_custom_call.1} parent=43 // pred_region
          %s978 = smul.u32 16, %s26
          %p979 = scmp.lt.s32.totalorder %s25, 1
          %s980 = scalar_select %p979, %s25, 1
          %p981 = scmp.lt.s32.totalorder %s978, 15
          %s982 = scalar_select %p981, %s978, 15
          %s983 = smul.addr %s980, 16
          %s984 = sadd.s32 %s982, %s983
          %s985 = smul.addr %s984, 8
          %s986 = scalar_lea.vmem %s3, %s985
        $region48: #{tpu_custom_call.1} parent=43 // pred_fallthru
          _
        // Predicated region
        $region49: #{tpu_custom_call.1} parent=43 // pred_check
          %p987 = pneg %p165
        $region50: #{tpu_custom_call.1} parent=43 // pred_check_branch
          %989 = sbr.rel (%p987) target = $region52
        $region51: #{tpu_custom_call.1} parent=43 // pred_region
          %s990 = sand.u32 %s150, 1
          %s991 = scalar_lea.sflag [#allocation3], %s990
          %s992 = sand.u32 %s150, 1
          %s993 = smul.addr %s992, 128
          %s994 = scalar_lea.vmem [#allocation2], %s993
          %995 = dma.done %s991, 2048
        $region52: #{tpu_custom_call.1} parent=43 // pred_fallthru
          _
      $region44: #{tpu_custom_call.1} parent=5 // pred_fallthru
        _
    $region6: #{tpu_custom_call.1} parent=1 // loop_footer
      %s18 = sadd.s32 1, %s14
    $region7: #{tpu_custom_call.1} parent=1 // loop_footer_branch
      %13 = sbr.rel target = $region3
    $region8: #{tpu_custom_call.1} parent=1 // loop_exit
      _
    %996 = vsyncpa [#allocation3], 1
    %s997 = scalar_lea.sflag [#allocation3], 1
    %998 = vsyncpa %s997, 1

</llo_original>
